<compile_context>
chip_gen: v5e
topology: v5e:2x2
jax: 0.10.0
libtpu: 0.0.40
codegen_flags: <defaults>
</compile_context>

<pallas_src>
import jax
import jax.numpy as jnp
import numpy as np
from jax.experimental import pallas as pl
from jax.experimental.pallas import tpu as pltpu

# ------------------------- configuration (small shapes) ----------------------
B = 2            # batch
N = 8            # number of nodes
HIDDEN = 32      # hidden_dim
NUM_HEADS = 4
HEAD_DIM = HIDDEN // NUM_HEADS
DE = N * HIDDEN  # lane-dense width = 256 (multiple of 128)


# ------------------------------ Pallas kernel ---------------------------------
def _mha_fused_kernel(xf_ref, xd_ref, ed_ref, mrow_ref, mkey_ref,
                      wq_ref, wbig_ref, ssum_ref, wox_ref,
                      bbig_ref, box_ref,
                      x_out_ref, e_out_ref):
    """Whole batch, all heads, output projections and masking in one program.

    Lane layout of the 256-wide tensors: lane = j*HIDDEN + h*HEAD_DIM + d
    (key/neighbour node j, head h, head feature d).
    w_big lane chunks : [ Wk_bd | Wv_bd | We_bd | headsum_bd | WOe_bd ]
    b_big lane chunks : [ bk    | bv    | be    | bq*scale   | bOe    ]
    """
    xf = xf_ref[...]            # (B*N, H)     rows = (b, i)
    xd = xd_ref[...]            # (B,   N*H)   lanes = (j, d)
    ed = ed_ref[...]            # (B*N, N*H)   rows = (b, i), lanes = (j, d)
    mrow = mrow_ref[...]        # (B*N, 1)     node_mask[b, i]
    mkey = mkey_ref[...]        # (B,   N*H)   node_mask[b, j] per lane

    # --- fused input projections (1/sqrt(d) pre-folded into Wq / bq) ---------
    # q replicated across the key-node lane chunks.
    q_exp = (jnp.dot(xf, wq_ref[...], preferred_element_type=jnp.float32)
             + bbig_ref[:, 3 * DE:4 * DE])                        # (B*N, N*H)

    # k and v per key node in the lane-dense per-batch layout, broadcast over
    # the query rows of that batch (sublane broadcast + leading-dim collapse).
    kv = (jnp.dot(xd, wbig_ref[:, 0:2 * DE],
                  preferred_element_type=jnp.float32)
          + bbig_ref[:, 0:2 * DE])                                # (B, 2*N*H)
    kv_exp = jnp.broadcast_to(kv[:, None, :],
                              (B, N, 2 * DE)).reshape(B * N, 2 * DE)
    k_exp = kv_exp[:, 0:DE]
    v_exp = kv_exp[:, DE:2 * DE]
    mkey_exp = jnp.broadcast_to(mkey[:, None, :],
                                (B, N, DE)).reshape(B * N, DE)

    # edge projection (block-diagonal I_N (x) We).
    ep = (jnp.dot(ed, wbig_ref[:, 2 * DE:3 * DE],
                  preferred_element_type=jnp.float32)
          + bbig_ref[:, 2 * DE:3 * DE])                           # (B*N, N*H)

    # --- scaled per-head scores == the reference e_cat -----------------------
    scores = q_exp * k_exp * ep                                   # (B*N, N*H)

    # One matmul produces BOTH the per-head logits (head sums replicated over
    # each head's lanes) and the WOe output projection of the scores.
    sc2 = jnp.dot(scores, wbig_ref[:, 3 * DE:5 * DE],
                  preferred_element_type=jnp.float32)             # (B*N, 2*N*H)
    logits = sc2[:, 0:DE]
    e_pre = sc2[:, DE:2 * DE] + bbig_ref[:, 4 * DE:5 * DE]

    # --- key-masked softmax over the node_j lane chunks ----------------------
    # A row-wide max is a valid stabilizing shift (softmax is shift-invariant
    # within every (query, head) group).
    keep = mkey_exp > 0.0
    logits = jnp.where(keep, logits, -1e9)
    m = jnp.max(logits, axis=-1, keepdims=True)                   # (B*N, 1)
    p = jnp.exp(logits - m)
    p = jnp.where(keep, p, 0.0)

    # --- att @ V and the softmax denominator in ONE chunk-sum matmul ---------
    pv = p * v_exp
    both = jnp.dot(jnp.concatenate([pv, p], axis=0), ssum_ref[...],
                   preferred_element_type=jnp.float32)            # (2*B*N, H)
    numer = both[0:B * N, :]
    denom = jnp.maximum(both[B * N:2 * B * N, :], 1e-9)
    x_att = numer / denom                                         # (B*N, H)

    # --- output projections + node/edge masking (dropout=0 -> identity) ------
    x_out = (jnp.dot(x_att, wox_ref[...], preferred_element_type=jnp.float32)
             + box_ref[...]) * mrow
    x_out_ref[...] = x_out.astype(x_out_ref.dtype)

    e_out = e_pre * mrow * mkey_exp                # lane-dense, unmasked store
    e_out_ref[...] = e_out.astype(e_out_ref.dtype)


# ------------------------------- host wrapper ----------------------------------
@jax.jit
def mha_forward(x, e, node_mask, fp):
    xf = x.reshape(B * N, HIDDEN)                  # rows = (b, i)
    xd = x.reshape(B, N * HIDDEN)                  # lane-dense per batch
    ed = e.reshape(B * N, N * HIDDEN)              # lane-dense (last dim 256)
    mrow = node_mask.reshape(B * N, 1)
    mkey = jnp.repeat(node_mask, HIDDEN, axis=1)   # (B, N*HIDDEN)

    vmem = pl.BlockSpec(memory_space=pltpu.MemorySpace.VMEM)
    x_out, e_out = pl.pallas_call(
        _mha_fused_kernel,
        out_shape=(
            jax.ShapeDtypeStruct((B * N, HIDDEN), jnp.float32),
            jax.ShapeDtypeStruct((B * N, N * HIDDEN), jnp.float32),
        ),
        # Single program over the whole (tiny) batch: no grid, whole arrays
        # resident in VMEM (~1.4 MiB total).  If B grows, add a leading
        # "parallel" batch grid axis with the same lane-dense block shapes,
        # sized so double-buffered e_in/e_out stay inside the scoped VMEM
        # budget (tightest on v5e: 16 MiB, v7x: 32 MiB).
        in_specs=[vmem] * 11,
        out_specs=(vmem, vmem),
    )(xf, xd, ed, mrow, mkey,
      fp["wq_t"], fp["w_big"], fp["ssum"], fp["wox"], fp["b_big"], fp["box"])
    return x_out.reshape(B, N, HIDDEN), e_out.reshape(B, N, N, HIDDEN)


def fuse_params(params):
    """Build the fused, lane-dense weight operands (host side, done once)."""
    hp = params["heads"]

    def cat_w(w):   # (NUM_HEADS, HIDDEN, HEAD_DIM) -> (HIDDEN, HIDDEN), head-major
        return jnp.transpose(w, (1, 0, 2)).reshape(HIDDEN, HIDDEN)

    def cat_b(b):   # (NUM_HEADS, 1, HEAD_DIM) -> (1, HIDDEN)
        return b.reshape(1, HIDDEN)

    Wq, bq = cat_w(hp["wq"]), cat_b(hp["bq"])
    Wk, bk = cat_w(hp["wk"]), cat_b(hp["bk"])
    Wv, bv = cat_w(hp["wv"]), cat_b(hp["bv"])
    We, be = cat_w(hp["we"]), cat_b(hp["be"])
    scale = 1.0 / np.sqrt(HEAD_DIM)

    eye_n = jnp.eye(N, dtype=jnp.float32)
    bdiag = lambda w: jnp.kron(eye_n, w)           # (H,H) -> (N*H, N*H)
    tile_l = lambda b: jnp.tile(b, (1, N))         # (1,H) -> (1, N*H)

    # per-(i,j) "sum over each head's features, replicate over its lanes"
    blk = jnp.kron(jnp.eye(NUM_HEADS, dtype=jnp.float32),
                   jnp.ones((HEAD_DIM, HEAD_DIM), jnp.float32))   # (H, H)

    w_big = jnp.concatenate(
        [bdiag(Wk), bdiag(Wv), bdiag(We), bdiag(blk), bdiag(params["WOe_w"])],
        axis=1)                                                   # (256, 1280)
    b_big = jnp.concatenate(
        [tile_l(bk), tile_l(bv), tile_l(be), tile_l(bq * scale),
         tile_l(params["WOe_b"])],
        axis=1)                                                   # (1, 1280)

    return {
        "wq_t": jnp.tile(Wq * scale, (1, N)),                     # (32, 256)
        "w_big": w_big,
        "ssum": jnp.tile(jnp.eye(HIDDEN, dtype=jnp.float32), (N, 1)),  # (256, 32)
        "wox": params["WOx_w"], "box": params["WOx_b"],
        "b_big": b_big,
    }


# --------------------------- pure-JAX reference -------------------------------
def mha_reference(x, e, node_mask, params):
    hp = params["heads"]
    xs, es = [], []
    scale = 1.0 / np.sqrt(HEAD_DIM)
    for h in range(NUM_HEADS):
        q = x @ hp["wq"][h] + hp["bq"][h]
        k = x @ hp["wk"][h] + hp["bk"][h]
        v = x @ hp["wv"][h] + hp["bv"][h]
        ep = e @ hp["we"][h] + hp["be"][h]
        scores = q[:, :, None, :] * k[:, None, :, :] * ep * scale
        es.append(scores)
        logits = scores.sum(-1)
        km = node_mask[:, None, :] > 0
        logits = jnp.where(km, logits, -1e9)
        p = jnp.exp(logits - logits.max(-1, keepdims=True))
        p = jnp.where(km, p, 0.0)
        att = p / jnp.maximum(p.sum(-1, keepdims=True), 1e-9)
        xs.append(att @ v)
    x_cat = jnp.concatenate(xs, axis=2)
    e_cat = jnp.concatenate(es, axis=3)
    x_mask = node_mask[:, :, None]
    e_mask1 = x_mask[:, :, None, :]
    e_mask2 = x_mask[:, None, :, :]
    x_out = (x_cat @ params["WOx_w"] + params["WOx_b"]) * x_mask
    e_out = (e_cat @ params["WOe_w"] + params["WOe_b"]) * e_mask1 * e_mask2
    return x_out, e_out


# ------------------------------- parameters -----------------------------------
def init_params(key):
    def lin(k, fan_in, shape):
        bound = 1.0 / np.sqrt(fan_in)
        return jax.random.uniform(k, shape, jnp.float32, -bound, bound)

    keys = jax.random.split(key, 12)
    heads = {
        "wq": lin(keys[0], HIDDEN, (NUM_HEADS, HIDDEN, HEAD_DIM)),
        "bq": lin(keys[1], HIDDEN, (NUM_HEADS, 1, HEAD_DIM)),
        "wk": lin(keys[2], HIDDEN, (NUM_HEADS, HIDDEN, HEAD_DIM)),
        "bk": lin(keys[3], HIDDEN, (NUM_HEADS, 1, HEAD_DIM)),
        "wv": lin(keys[4], HIDDEN, (NUM_HEADS, HIDDEN, HEAD_DIM)),
        "bv": lin(keys[5], HIDDEN, (NUM_HEADS, 1, HEAD_DIM)),
        "we": lin(keys[6], HIDDEN, (NUM_HEADS, HIDDEN, HEAD_DIM)),
        "be": lin(keys[7], HIDDEN, (NUM_HEADS, 1, HEAD_DIM)),
    }
    return {
        "heads": heads,
        # stored input-major (in, out), i.e. PyTorch W.T
        "WOx_w": lin(keys[8], HIDDEN, (HIDDEN, HIDDEN)),
        "WOx_b": lin(keys[9], HIDDEN, (1, HIDDEN)),
        "WOe_w": lin(keys[10], HIDDEN, (HIDDEN, HIDDEN)),
        "WOe_b": lin(keys[11], HIDDEN, (1, HIDDEN)),
    }


# ---------------------------------- main ---------------------------------------
if __name__ == "__main__":
    key = jax.random.PRNGKey(0)
    kx, ke, kp = jax.random.split(key, 3)
    x = jax.random.normal(kx, (B, N, HIDDEN), jnp.float32)
    e = jax.random.normal(ke, (B, N, N, HIDDEN), jnp.float32)
    node_mask = jnp.ones((B, N), jnp.float32)
    node_mask = node_mask.at[1, N - 2:].set(0.0)   # exercise masking

    params = init_params(kp)
    fused = fuse_params(params)

    x_out, e_out = mha_forward(x, e, node_mask, fused)
    jax.block_until_ready((x_out, e_out))

    x_ref, e_ref = mha_reference(x, e, node_mask, params)
    np.testing.assert_allclose(np.asarray(x_out), np.asarray(x_ref),
                               rtol=1e-4, atol=1e-4)
    np.testing.assert_allclose(np.asarray(e_out), np.asarray(e_ref),
                               rtol=1e-4, atol=1e-4)

    print("KERNEL_OK")
</pallas_src>

<mosaic_0001>
module attributes {stable_mosaic.version = 11 : i64} {
  func.func @_mha_fused_kernel(%arg0: memref<16x32xf32, #tpu.memory_space<vmem>>, %arg1: memref<2x256xf32, #tpu.memory_space<vmem>>, %arg2: memref<16x256xf32, #tpu.memory_space<vmem>>, %arg3: memref<16x1xf32, #tpu.memory_space<vmem>>, %arg4: memref<2x256xf32, #tpu.memory_space<vmem>>, %arg5: memref<32x256xf32, #tpu.memory_space<vmem>>, %arg6: memref<256x1280xf32, #tpu.memory_space<vmem>>, %arg7: memref<256x32xf32, #tpu.memory_space<vmem>>, %arg8: memref<32x32xf32, #tpu.memory_space<vmem>>, %arg9: memref<1x1280xf32, #tpu.memory_space<vmem>>, %arg10: memref<1x32xf32, #tpu.memory_space<vmem>>, %arg11: memref<16x32xf32, #tpu.memory_space<vmem>>, %arg12: memref<16x256xf32, #tpu.memory_space<vmem>>) attributes {dimension_semantics = [], scalar_prefetch = 0 : i64, scratch_operands = 0 : i64, tpu.core_type = #tpu.core_type<tc>} {
    %c0 = arith.constant 0 : index
    %c0_0 = arith.constant 0 : index
    %0 = vector.load %arg0[%c0, %c0_0] : memref<16x32xf32, #tpu.memory_space<vmem>>, vector<16x32xf32>
    %c0_1 = arith.constant 0 : index
    %c0_2 = arith.constant 0 : index
    %1 = vector.load %arg1[%c0_1, %c0_2] : memref<2x256xf32, #tpu.memory_space<vmem>>, vector<2x256xf32>
    %c0_3 = arith.constant 0 : index
    %c0_4 = arith.constant 0 : index
    %2 = vector.load %arg2[%c0_3, %c0_4] : memref<16x256xf32, #tpu.memory_space<vmem>>, vector<16x256xf32>
    %c0_5 = arith.constant 0 : index
    %c0_6 = arith.constant 0 : index
    %3 = vector.load %arg3[%c0_5, %c0_6] : memref<16x1xf32, #tpu.memory_space<vmem>>, vector<16x1xf32>
    %c0_7 = arith.constant 0 : index
    %c0_8 = arith.constant 0 : index
    %4 = vector.load %arg4[%c0_7, %c0_8] : memref<2x256xf32, #tpu.memory_space<vmem>>, vector<2x256xf32>
    %c0_9 = arith.constant 0 : index
    %c0_10 = arith.constant 0 : index
    %5 = vector.load %arg5[%c0_9, %c0_10] : memref<32x256xf32, #tpu.memory_space<vmem>>, vector<32x256xf32>
    %cst = arith.constant dense<0.000000e+00> : vector<16x256xf32>
    %6 = tpu.matmul %0, %5, %cst {dimension_numbers = #tpu.dot_dimension_numbers<[1], [0], [0], [1], [0, 0, 1, 1], [], []>} : vector<16x32xf32>, vector<32x256xf32>, vector<16x256xf32> -> vector<16x256xf32>
    %c0_11 = arith.constant 0 : index
    %c768 = arith.constant 768 : index
    %7 = vector.load %arg9[%c0_11, %c768] : memref<1x1280xf32, #tpu.memory_space<vmem>>, vector<1x256xf32>
    %8 = vector.broadcast %7 : vector<1x256xf32> to vector<16x256xf32>
    %9 = arith.addf %6, %8 : vector<16x256xf32>
    %c0_12 = arith.constant 0 : index
    %c0_13 = arith.constant 0 : index
    %10 = vector.load %arg6[%c0_12, %c0_13] : memref<256x1280xf32, #tpu.memory_space<vmem>>, vector<256x512xf32>
    %cst_14 = arith.constant dense<0.000000e+00> : vector<2x512xf32>
    %11 = tpu.matmul %1, %10, %cst_14 {dimension_numbers = #tpu.dot_dimension_numbers<[1], [0], [0], [1], [0, 0, 1, 1], [], []>} : vector<2x256xf32>, vector<256x512xf32>, vector<2x512xf32> -> vector<2x512xf32>
    %c0_15 = arith.constant 0 : index
    %c0_16 = arith.constant 0 : index
    %12 = vector.load %arg9[%c0_15, %c0_16] : memref<1x1280xf32, #tpu.memory_space<vmem>>, vector<1x512xf32>
    %13 = vector.broadcast %12 : vector<1x512xf32> to vector<2x512xf32>
    %14 = arith.addf %11, %13 : vector<2x512xf32>
    %15 = vector.shape_cast %14 : vector<2x512xf32> to vector<2x1x512xf32>
    %16 = vector.shape_cast %15 : vector<2x1x512xf32> to vector<2x1x512xf32>
    %17 = vector.broadcast %16 : vector<2x1x512xf32> to vector<2x8x512xf32>
    %18 = vector.shape_cast %17 : vector<2x8x512xf32> to vector<16x512xf32>
    %19 = vector.extract_strided_slice %18 {offsets = [0, 0], sizes = [16, 256], strides = [1, 1]} : vector<16x512xf32> to vector<16x256xf32>
    %20 = vector.extract_strided_slice %18 {offsets = [0, 256], sizes = [16, 256], strides = [1, 1]} : vector<16x512xf32> to vector<16x256xf32>
    %21 = vector.shape_cast %4 : vector<2x256xf32> to vector<2x1x256xf32>
    %22 = vector.shape_cast %21 : vector<2x1x256xf32> to vector<2x1x256xf32>
    %23 = vector.broadcast %22 : vector<2x1x256xf32> to vector<2x8x256xf32>
    %24 = vector.shape_cast %23 : vector<2x8x256xf32> to vector<16x256xf32>
    %c0_17 = arith.constant 0 : index
    %c512 = arith.constant 512 : index
    %25 = vector.load %arg6[%c0_17, %c512] : memref<256x1280xf32, #tpu.memory_space<vmem>>, vector<256x256xf32>
    %cst_18 = arith.constant dense<0.000000e+00> : vector<16x256xf32>
    %26 = tpu.matmul %2, %25, %cst_18 {dimension_numbers = #tpu.dot_dimension_numbers<[1], [0], [0], [1], [0, 0, 1, 1], [], []>} : vector<16x256xf32>, vector<256x256xf32>, vector<16x256xf32> -> vector<16x256xf32>
    %c0_19 = arith.constant 0 : index
    %c512_20 = arith.constant 512 : index
    %27 = vector.load %arg9[%c0_19, %c512_20] : memref<1x1280xf32, #tpu.memory_space<vmem>>, vector<1x256xf32>
    %28 = vector.broadcast %27 : vector<1x256xf32> to vector<16x256xf32>
    %29 = arith.addf %26, %28 : vector<16x256xf32>
    %30 = arith.mulf %9, %19 : vector<16x256xf32>
    %31 = arith.mulf %30, %29 : vector<16x256xf32>
    %c0_21 = arith.constant 0 : index
    %c768_22 = arith.constant 768 : index
    %32 = vector.load %arg6[%c0_21, %c768_22] : memref<256x1280xf32, #tpu.memory_space<vmem>>, vector<256x512xf32>
    %cst_23 = arith.constant dense<0.000000e+00> : vector<16x512xf32>
    %33 = tpu.matmul %31, %32, %cst_23 {dimension_numbers = #tpu.dot_dimension_numbers<[1], [0], [0], [1], [0, 0, 1, 1], [], []>} : vector<16x256xf32>, vector<256x512xf32>, vector<16x512xf32> -> vector<16x512xf32>
    %34 = vector.extract_strided_slice %33 {offsets = [0, 0], sizes = [16, 256], strides = [1, 1]} : vector<16x512xf32> to vector<16x256xf32>
    %35 = vector.extract_strided_slice %33 {offsets = [0, 256], sizes = [16, 256], strides = [1, 1]} : vector<16x512xf32> to vector<16x256xf32>
    %c0_24 = arith.constant 0 : index
    %c1024 = arith.constant 1024 : index
    %36 = vector.load %arg9[%c0_24, %c1024] : memref<1x1280xf32, #tpu.memory_space<vmem>>, vector<1x256xf32>
    %37 = vector.broadcast %36 : vector<1x256xf32> to vector<16x256xf32>
    %38 = arith.addf %35, %37 : vector<16x256xf32>
    %cst_25 = arith.constant 0.000000e+00 : f32
    %39 = vector.broadcast %cst_25 : f32 to vector<16x256xf32>
    %40 = arith.cmpf ogt, %24, %39 : vector<16x256xf32>
    %cst_26 = arith.constant -1.000000e+09 : f32
    %41 = vector.broadcast %cst_26 : f32 to vector<16x256xf32>
    %42 = arith.select %40, %34, %41 : vector<16x256xi1>, vector<16x256xf32>
    %cst_27 = arith.constant dense<0xFF800000> : vector<16xf32>
    %43 = vector.multi_reduction <maximumf>, %42, %cst_27 [1] : vector<16x256xf32> to vector<16xf32>
    %44 = vector.shape_cast %43 : vector<16xf32> to vector<16x1xf32>
    %45 = vector.broadcast %44 : vector<16x1xf32> to vector<16x256xf32>
    %46 = arith.subf %42, %45 : vector<16x256xf32>
    %47 = math.exp %46 : vector<16x256xf32>
    %cst_28 = arith.constant 0.000000e+00 : f32
    %48 = vector.broadcast %cst_28 : f32 to vector<16x256xf32>
    %49 = arith.select %40, %47, %48 : vector<16x256xi1>, vector<16x256xf32>
    %50 = arith.mulf %49, %20 : vector<16x256xf32>
    %51 = tpu.concatenate %50, %49 in 0 : vector<16x256xf32>, vector<16x256xf32> -> vector<32x256xf32>
    %c0_29 = arith.constant 0 : index
    %c0_30 = arith.constant 0 : index
    %52 = vector.load %arg7[%c0_29, %c0_30] : memref<256x32xf32, #tpu.memory_space<vmem>>, vector<256x32xf32>
    %cst_31 = arith.constant dense<0.000000e+00> : vector<32x32xf32>
    %53 = tpu.matmul %51, %52, %cst_31 {dimension_numbers = #tpu.dot_dimension_numbers<[1], [0], [0], [1], [0, 0, 1, 1], [], []>} : vector<32x256xf32>, vector<256x32xf32>, vector<32x32xf32> -> vector<32x32xf32>
    %54 = vector.extract_strided_slice %53 {offsets = [0, 0], sizes = [16, 32], strides = [1, 1]} : vector<32x32xf32> to vector<16x32xf32>
    %55 = vector.extract_strided_slice %53 {offsets = [16, 0], sizes = [16, 32], strides = [1, 1]} : vector<32x32xf32> to vector<16x32xf32>
    %cst_32 = arith.constant 9.99999971E-10 : f32
    %56 = vector.broadcast %cst_32 : f32 to vector<16x32xf32>
    %57 = arith.maximumf %55, %56 : vector<16x32xf32>
    %58 = arith.divf %54, %57 : vector<16x32xf32>
    %c0_33 = arith.constant 0 : index
    %c0_34 = arith.constant 0 : index
    %59 = vector.load %arg8[%c0_33, %c0_34] : memref<32x32xf32, #tpu.memory_space<vmem>>, vector<32x32xf32>
    %cst_35 = arith.constant dense<0.000000e+00> : vector<16x32xf32>
    %60 = tpu.matmul %58, %59, %cst_35 {dimension_numbers = #tpu.dot_dimension_numbers<[1], [0], [0], [1], [0, 0, 1, 1], [], []>} : vector<16x32xf32>, vector<32x32xf32>, vector<16x32xf32> -> vector<16x32xf32>
    %c0_36 = arith.constant 0 : index
    %c0_37 = arith.constant 0 : index
    %61 = vector.load %arg10[%c0_36, %c0_37] : memref<1x32xf32, #tpu.memory_space<vmem>>, vector<1x32xf32>
    %62 = vector.broadcast %61 : vector<1x32xf32> to vector<16x32xf32>
    %63 = arith.addf %60, %62 : vector<16x32xf32>
    %64 = vector.broadcast %3 : vector<16x1xf32> to vector<16x32xf32>
    %65 = arith.mulf %63, %64 : vector<16x32xf32>
    %c0_38 = arith.constant 0 : index
    %c0_39 = arith.constant 0 : index
    %66 = vector.load %arg11[%c0_38, %c0_39] : memref<16x32xf32, #tpu.memory_space<vmem>>, vector<16x32xf32>
    tpu.vector_store %arg11[%c0_38, %c0_39], %65 {strides = array<i32>} : memref<16x32xf32, #tpu.memory_space<vmem>>, vector<16x32xf32>,
    %67 = vector.broadcast %3 : vector<16x1xf32> to vector<16x256xf32>
    %68 = arith.mulf %38, %67 : vector<16x256xf32>
    %69 = arith.mulf %68, %24 : vector<16x256xf32>
    %c0_40 = arith.constant 0 : index
    %c0_41 = arith.constant 0 : index
    %70 = vector.load %arg12[%c0_40, %c0_41] : memref<16x256xf32, #tpu.memory_space<vmem>>, vector<16x256xf32>
    tpu.vector_store %arg12[%c0_40, %c0_41], %69 {strides = array<i32>} : memref<16x256xf32, #tpu.memory_space<vmem>>, vector<16x256xf32>,
    return
  }
}

</mosaic_0001>

<llo_original>
// kernel: mha_forward.1
$region0: #{mha_forward.1}
  #allocation0 [shape = 'u32[]', space=smem, size = 0x4, offset = 0x4, fixed_abs, tag = 'smem constant byte address 0x4 - core index']
  #allocation1 [shape = 'u32[72,128]{1,0:T(1,128)}', space=vmem, size = 0x9000, scoped, tag = 'internal scratch']
  %s0 = inlined_call_operand.hbm [shape: f32[16,32], index: 0, kind: input, shape index: {}]
  %s1 = inlined_call_operand.vmem [shape: f32[2,256], index: 1, kind: input, shape index: {}]
  %s2 = inlined_call_operand.vmem [shape: f32[16,256], index: 2, kind: input, shape index: {}]
  %s3 = inlined_call_operand.vmem [shape: f32[16,1], index: 3, kind: input, shape index: {}]
  %s4 = inlined_call_operand.vmem [shape: f32[2,256], index: 4, kind: input, shape index: {}]
  %s5 = inlined_call_operand.hbm [shape: f32[32,256], index: 5, kind: input, shape index: {}]
  %s6 = inlined_call_operand.hbm [shape: f32[256,1280], index: 6, kind: input, shape index: {}]
  %s7 = inlined_call_operand.vmem [shape: f32[256,32], index: 7, kind: input, shape index: {}]
  %s8 = inlined_call_operand.hbm [shape: f32[32,32], index: 8, kind: input, shape index: {}]
  %s9 = inlined_call_operand.hbm [shape: f32[1,1280], index: 9, kind: input, shape index: {}]
  %s10 = inlined_call_operand.hbm [shape: f32[1,32], index: 10, kind: input, shape index: {}]
  %s11 = inlined_call_operand.hbm [shape: f32[16,32], index: 11, kind: output, shape index: {0}]
  %s12 = inlined_call_operand.vmem [shape: f32[16,256], index: 12, kind: output, shape index: {1}]
  %13 = xla_tuple %s11, %s12
  %s14 = sld [smem:[#allocation0]]
  $region86: #{mha_forward.1} parent=0
    _
  %s16 = ssub.s32 1, %s14
  %s17 = scalar_select 0, %s16, %s14
  $region1: #{mha_forward.1} parent=0
    #allocation2 [shape = 'u8[8192]{0}', space=vmem, size = 0x2000, scoped, tag = 'input window, operand 0, single buffered']
    #allocation3 [shape = 's32[1]{0}', space=sflag, size = 0x4, scoped, tag = 'scoped memory for mha_forward.1']
    #allocation4 [shape = 's32[1]{0}', space=sflag, size = 0x4, scoped, tag = 'scoped memory for mha_forward.1']
    #allocation5 [shape = 'u8[32768]{0}', space=vmem, size = 0x8000, scoped, tag = 'input window, operand 5, single buffered']
    #allocation6 [shape = 's32[1]{0}', space=sflag, size = 0x4, scoped, tag = 'scoped memory for mha_forward.1']
    #allocation7 [shape = 'u8[1310720]{0}', space=vmem, size = 0x140000, scoped, tag = 'input window, operand 6, single buffered']
    #allocation8 [shape = 'u8[16384]{0}', space=vmem, size = 0x4000, scoped, tag = 'input window, operand 8, single buffered']
    #allocation9 [shape = 's32[1]{0}', space=sflag, size = 0x4, scoped, tag = 'scoped memory for mha_forward.1']
    #allocation10 [shape = 'u8[5120]{0}', space=vmem, size = 0x1400, scoped, tag = 'input window, operand 9, single buffered']
    #allocation11 [shape = 'u8[512]{0}', space=vmem, size = 0x400, scoped, tag = 'input window, operand 10, single buffered']
    #allocation12 [shape = 's32[1]{0}', space=sflag, size = 0x4, scoped, tag = 'scoped memory for mha_forward.1']
    #allocation13 [shape = 'u8[8192]{0}', space=vmem, size = 0x2000, scoped, tag = 'output window, operand 0, single buffered']
    %18 = vsyncpa [#allocation3], 0
    %19 = vsyncpa [#allocation6], 0
    %20 = vsyncpa [#allocation9], 0
    %21 = vsyncpa [#allocation12], 0
    %22 = vsyncpa [#allocation4], 0
    // Predicated region
    $region2: #{mha_forward.1} parent=1 // pred_check
      _
    $region3: #{mha_forward.1} parent=1 // pred_check_branch
      %24 = sbr.rel (0) target = $region5
    $region4: #{mha_forward.1} parent=1 // pred_region
      %26 = vsyncadd [#allocation3], 0
      %s27 = sshll.u32 %s0, 4
      %s28 = int_to_ptr.hbm [resolvable:$true] %s27
      %s29 = sshll.u32 [#allocation2], 4
      %s30 = int_to_ptr.vmem [resolvable:$true] %s29
      %35 = dma.hbm_to_vmem [thread:$0]  %s28, 256, %s30, [#allocation3], 128, 128, 8
    $region5: #{mha_forward.1} parent=1 // pred_fallthru
      _
    // Predicated region
    $region6: #{mha_forward.1} parent=1 // pred_check
      _
    $region7: #{mha_forward.1} parent=1 // pred_check_branch
      %37 = sbr.rel (0) target = $region9
    $region8: #{mha_forward.1} parent=1 // pred_region
      _
    $region9: #{mha_forward.1} parent=1 // pred_fallthru
      _
    // Predicated region
    $region10: #{mha_forward.1} parent=1 // pred_check
      _
    $region11: #{mha_forward.1} parent=1 // pred_check_branch
      %39 = sbr.rel (0) target = $region13
    $region12: #{mha_forward.1} parent=1 // pred_region
      _
    $region13: #{mha_forward.1} parent=1 // pred_fallthru
      _
    // Predicated region
    $region14: #{mha_forward.1} parent=1 // pred_check
      _
    $region15: #{mha_forward.1} parent=1 // pred_check_branch
      %41 = sbr.rel (0) target = $region17
    $region16: #{mha_forward.1} parent=1 // pred_region
      _
    $region17: #{mha_forward.1} parent=1 // pred_fallthru
      _
    // Predicated region
    $region18: #{mha_forward.1} parent=1 // pred_check
      _
    $region19: #{mha_forward.1} parent=1 // pred_check_branch
      %43 = sbr.rel (0) target = $region21
    $region20: #{mha_forward.1} parent=1 // pred_region
      _
    $region21: #{mha_forward.1} parent=1 // pred_fallthru
      _
    // Predicated region
    $region22: #{mha_forward.1} parent=1 // pred_check
      _
    $region23: #{mha_forward.1} parent=1 // pred_check_branch
      %45 = sbr.rel (0) target = $region25
    $region24: #{mha_forward.1} parent=1 // pred_region
      %47 = vsyncadd [#allocation6], 0
      %s48 = sshll.u32 %s5, 4
      %s49 = int_to_ptr.hbm [resolvable:$true] %s48
      %s50 = sshll.u32 [#allocation5], 4
      %s51 = int_to_ptr.vmem [resolvable:$true] %s50
      %56 = dma.hbm_to_vmem [thread:$0]  %s49, 1024, %s51, [#allocation6], 256, 256, 16
    $region25: #{mha_forward.1} parent=1 // pred_fallthru
      _
    // Predicated region
    $region26: #{mha_forward.1} parent=1 // pred_check
      _
    $region27: #{mha_forward.1} parent=1 // pred_check_branch
      %58 = sbr.rel (0) target = $region29
    $region28: #{mha_forward.1} parent=1 // pred_region
      %60 = vsyncadd [#allocation6], 0
      %s61 = sshll.u32 %s6, 4
      %s62 = int_to_ptr.hbm [resolvable:$true] %s61
      %s63 = sshll.u32 [#allocation7], 4
      %s64 = int_to_ptr.vmem [resolvable:$true] %s63
      %69 = dma.hbm_to_vmem [thread:$0]  %s62, 40960, %s64, [#allocation6], 1280, 1280, 80
    $region29: #{mha_forward.1} parent=1 // pred_fallthru
      _
    // Predicated region
    $region30: #{mha_forward.1} parent=1 // pred_check
      _
    $region31: #{mha_forward.1} parent=1 // pred_check_branch
      %71 = sbr.rel (0) target = $region33
    $region32: #{mha_forward.1} parent=1 // pred_region
      _
    $region33: #{mha_forward.1} parent=1 // pred_fallthru
      _
    // Predicated region
    $region34: #{mha_forward.1} parent=1 // pred_check
      _
    $region35: #{mha_forward.1} parent=1 // pred_check_branch
      %73 = sbr.rel (0) target = $region37
    $region36: #{mha_forward.1} parent=1 // pred_region
      %75 = vsyncadd [#allocation9], 0
      %s76 = sshll.u32 %s8, 4
      %s77 = int_to_ptr.hbm [resolvable:$true] %s76
      %s78 = sshll.u32 [#allocation8], 4
      %s79 = int_to_ptr.vmem [resolvable:$true] %s78
      %84 = dma.hbm_to_vmem [thread:$0]  %s77, 512, %s79, [#allocation9], 128, 128, 8
    $region37: #{mha_forward.1} parent=1 // pred_fallthru
      _
    // Predicated region
    $region38: #{mha_forward.1} parent=1 // pred_check
      _
    $region39: #{mha_forward.1} parent=1 // pred_check_branch
      %86 = sbr.rel (0) target = $region41
    $region40: #{mha_forward.1} parent=1 // pred_region
      %88 = vsyncadd [#allocation9], 0
      %s90 = sshll.u32 %s9, 4
      %s91 = int_to_ptr.hbm [resolvable:$true] %s90
      %s92 = sshll.u32 [#allocation10], 4
      %s93 = int_to_ptr.vmem [resolvable:$true] %s92
      %95 = dma.hbm_to_vmem [thread:$0]  %s91, 160, %s93, [#allocation9]
    $region41: #{mha_forward.1} parent=1 // pred_fallthru
      _
    // Predicated region
    $region42: #{mha_forward.1} parent=1 // pred_check
      _
    $region43: #{mha_forward.1} parent=1 // pred_check_branch
      %97 = sbr.rel (0) target = $region45
    $region44: #{mha_forward.1} parent=1 // pred_region
      %99 = vsyncadd [#allocation12], 0
      %s101 = sshll.u32 %s10, 4
      %s102 = int_to_ptr.hbm [resolvable:$true] %s101
      %s103 = sshll.u32 [#allocation11], 4
      %s104 = int_to_ptr.vmem [resolvable:$true] %s103
      %106 = dma.hbm_to_vmem [thread:$0]  %s102, 16, %s104, [#allocation12]
    $region45: #{mha_forward.1} parent=1 // pred_fallthru
      _
    // Predicated region
    $region46: #{mha_forward.1} parent=1 // pred_check
      _
    $region47: #{mha_forward.1} parent=1 // pred_check_branch
      %108 = sbr.rel (0) target = $region49
    $region48: #{mha_forward.1} parent=1 // pred_region
      %110 = dma.done [#allocation3], 256
    $region49: #{mha_forward.1} parent=1 // pred_fallthru
      _
    // Predicated region
    $region50: #{mha_forward.1} parent=1 // pred_check
      _
    $region51: #{mha_forward.1} parent=1 // pred_check_branch
      %112 = sbr.rel (0) target = $region53
    $region52: #{mha_forward.1} parent=1 // pred_region
      %114 = dma.done [#allocation6], 1024
    $region53: #{mha_forward.1} parent=1 // pred_fallthru
      _
    // Predicated region
    $region54: #{mha_forward.1} parent=1 // pred_check
      _
    $region55: #{mha_forward.1} parent=1 // pred_check_branch
      %116 = sbr.rel (0) target = $region57
    $region56: #{mha_forward.1} parent=1 // pred_region
      %118 = dma.done [#allocation6], 40960
    $region57: #{mha_forward.1} parent=1 // pred_fallthru
      _
    // Predicated region
    $region58: #{mha_forward.1} parent=1 // pred_check
      _
    $region59: #{mha_forward.1} parent=1 // pred_check_branch
      %120 = sbr.rel (0) target = $region61
    $region60: #{mha_forward.1} parent=1 // pred_region
      %122 = dma.done [#allocation9], 512
    $region61: #{mha_forward.1} parent=1 // pred_fallthru
      _
    // Predicated region
    $region62: #{mha_forward.1} parent=1 // pred_check
      _
    $region63: #{mha_forward.1} parent=1 // pred_check_branch
      %124 = sbr.rel (0) target = $region65
    $region64: #{mha_forward.1} parent=1 // pred_region
      %126 = dma.done [#allocation9], 160
    $region65: #{mha_forward.1} parent=1 // pred_fallthru
      _
    // Predicated region
    $region66: #{mha_forward.1} parent=1 // pred_check
      _
    $region67: #{mha_forward.1} parent=1 // pred_check_branch
      %128 = sbr.rel (0) target = $region69
    $region68: #{mha_forward.1} parent=1 // pred_region
      %130 = dma.done [#allocation12], 16
    $region69: #{mha_forward.1} parent=1 // pred_fallthru
      _
    %v131 = vld [vmem:[#allocation2] sm:$0xff]
    %v132 = vld [vmem:[#allocation2 + $0x8] sm:$0xff]
    %v133 = vld [vmem:[%s1] sm:$0xf]
    %v134 = vld [vmem:[%s2] sm:$0xff]
    %v135 = vld [vmem:[%s2 + $0x8] sm:$0xff]
    %v136 = vld [vmem:[%s2 + $0x10] sm:$0xff]
    %v137 = vld [vmem:[%s2 + $0x18] sm:$0xff]
    %v138 = vld [vmem:[%s3] sm:$0xff]
    %v139 = vld [vmem:[%s3 + $0x8] sm:$0xff]
    %v140 = vld [vmem:[%s4] sm:$0xf]
    %v141 = vld [vmem:[#allocation5] sm:$0xff]
    %v142 = vld [vmem:[#allocation5 + $0x8] sm:$0xff]
    %v143 = vld [vmem:[#allocation5 + $0x10] sm:$0xff]
    %v144 = vld [vmem:[#allocation5 + $0x18] sm:$0xff]
    %v145 = vld [vmem:[#allocation5 + $0x20] sm:$0xff]
    %v146 = vld [vmem:[#allocation5 + $0x28] sm:$0xff]
    %v147 = vld [vmem:[#allocation5 + $0x30] sm:$0xff]
    %v148 = vld [vmem:[#allocation5 + $0x38] sm:$0xff]
    %v149 = vld [vmem:[#allocation10 + $0x6] sm:$0x3]
    %v151 = vperm.slane %v149, 0
    %v152 = vperm.slane %v149, 1
    %vm155 = vcmask 261120
    %v157 = vsel %vm155, %v131, 0
    %v160 = vsel %vm155, %v132, 0
    %162 = vmatpush.msra.mxu0 0.0
    %163 = vmatpush.msra.mxu0 0.0
    %164 = vmatpush.msra.mxu0 0.0
    %165 = vmatpush.msra.mxu0 0.0
    %166 = vmatpush.msra.mxu0 0.0
    %167 = vmatpush.msra.mxu0 0.0
    %168 = vmatpush.msra.mxu0 0.0
    %169 = vmatpush.msra.mxu0 0.0
    %170 = vmatpush.msra.mxu0 0.0
    %171 = vmatpush.msra.mxu0 0.0
    %172 = vmatpush.msra.mxu0 0.0
    %173 = vmatpush.msra.mxu0 0.0
    %174 = vmatpush.msra.mxu0 %v147
    %175 = vmatpush.msra.mxu0 %v145
    %176 = vmatpush.msra.mxu0 %v143
    %177 = vmatpush.msra.mxu0 %v141
    %178 = vmatmul.f32.gmra.mxu0 %v157
    %v179 = vpop.f32.mrf.mxu0
    %v180 = vadd.f32 %v151, %v179
    %181 = vmatmul.f32.gmra.mxu0 %v160
    %v182 = vpop.f32.mrf.mxu0
    %v183 = vadd.f32 %v151, %v182
    %184 = vdwg.mxu0
    %185 = vmatpush.msra.mxu0 0.0
    %186 = vmatpush.msra.mxu0 0.0
    %187 = vmatpush.msra.mxu0 0.0
    %188 = vmatpush.msra.mxu0 0.0
    %189 = vmatpush.msra.mxu0 0.0
    %190 = vmatpush.msra.mxu0 0.0
    %191 = vmatpush.msra.mxu0 0.0
    %192 = vmatpush.msra.mxu0 0.0
    %193 = vmatpush.msra.mxu0 0.0
    %194 = vmatpush.msra.mxu0 0.0
    %195 = vmatpush.msra.mxu0 0.0
    %196 = vmatpush.msra.mxu0 0.0
    %197 = vmatpush.msra.mxu0 %v148
    %198 = vmatpush.msra.mxu0 %v146
    %199 = vmatpush.msra.mxu0 %v144
    %200 = vmatpush.msra.mxu0 %v142
    %201 = vmatmul.f32.gmra.mxu0 %v157
    %v202 = vpop.f32.mrf.mxu0
    %v203 = vadd.f32 %v152, %v202
    %204 = vmatmul.f32.gmra.mxu0 %v160
    %v205 = vpop.f32.mrf.mxu0
    %v206 = vadd.f32 %v152, %v205
    %207 = vdwg.mxu0
    %v208 = vld [vmem:[#allocation7] sm:$0xff]
    %v209 = vld [vmem:[#allocation7 + $0x8] sm:$0xff]
    %v210 = vld [vmem:[#allocation7 + $0x10] sm:$0xff]
    %v211 = vld [vmem:[#allocation7 + $0x18] sm:$0xff]
    %v212 = vld [vmem:[#allocation7 + $0x50] sm:$0xff]
    %v213 = vld [vmem:[#allocation7 + $0x58] sm:$0xff]
    %v214 = vld [vmem:[#allocation7 + $0x60] sm:$0xff]
    %v215 = vld [vmem:[#allocation7 + $0x68] sm:$0xff]
    %v216 = vld [vmem:[#allocation7 + $0xa0] sm:$0xff]
    %v217 = vld [vmem:[#allocation7 + $0xa8] sm:$0xff]
    %v218 = vld [vmem:[#allocation7 + $0xb0] sm:$0xff]
    %v219 = vld [vmem:[#allocation7 + $0xb8] sm:$0xff]
    %v220 = vld [vmem:[#allocation7 + $0xf0] sm:$0xff]
    %v221 = vld [vmem:[#allocation7 + $0xf8] sm:$0xff]
    %v222 = vld [vmem:[#allocation7 + $0x100] sm:$0xff]
    %v223 = vld [vmem:[#allocation7 + $0x108] sm:$0xff]
    %v224 = vld [vmem:[#allocation7 + $0x140] sm:$0xff]
    %v225 = vld [vmem:[#allocation7 + $0x148] sm:$0xff]
    %v226 = vld [vmem:[#allocation7 + $0x150] sm:$0xff]
    %v227 = vld [vmem:[#allocation7 + $0x158] sm:$0xff]
    %v228 = vld [vmem:[#allocation7 + $0x190] sm:$0xff]
    %v229 = vld [vmem:[#allocation7 + $0x198] sm:$0xff]
    %v230 = vld [vmem:[#allocation7 + $0x1a0] sm:$0xff]
    %v231 = vld [vmem:[#allocation7 + $0x1a8] sm:$0xff]
    %v232 = vld [vmem:[#allocation7 + $0x1e0] sm:$0xff]
    %v233 = vld [vmem:[#allocation7 + $0x1e8] sm:$0xff]
    %v234 = vld [vmem:[#allocation7 + $0x1f0] sm:$0xff]
    %v235 = vld [vmem:[#allocation7 + $0x1f8] sm:$0xff]
    %v236 = vld [vmem:[#allocation7 + $0x230] sm:$0xff]
    %v237 = vld [vmem:[#allocation7 + $0x238] sm:$0xff]
    %v238 = vld [vmem:[#allocation7 + $0x240] sm:$0xff]
    %v239 = vld [vmem:[#allocation7 + $0x248] sm:$0xff]
    %v240 = vld [vmem:[#allocation7 + $0x280] sm:$0xff]
    %v241 = vld [vmem:[#allocation7 + $0x288] sm:$0xff]
    %v242 = vld [vmem:[#allocation7 + $0x290] sm:$0xff]
    %v243 = vld [vmem:[#allocation7 + $0x298] sm:$0xff]
    %v244 = vld [vmem:[#allocation7 + $0x2d0] sm:$0xff]
    %v245 = vld [vmem:[#allocation7 + $0x2d8] sm:$0xff]
    %v246 = vld [vmem:[#allocation7 + $0x2e0] sm:$0xff]
    %v247 = vld [vmem:[#allocation7 + $0x2e8] sm:$0xff]
    %v248 = vld [vmem:[#allocation7 + $0x320] sm:$0xff]
    %v249 = vld [vmem:[#allocation7 + $0x328] sm:$0xff]
    %v250 = vld [vmem:[#allocation7 + $0x330] sm:$0xff]
    %v251 = vld [vmem:[#allocation7 + $0x338] sm:$0xff]
    %v252 = vld [vmem:[#allocation7 + $0x370] sm:$0xff]
    %v253 = vld [vmem:[#allocation7 + $0x378] sm:$0xff]
    %v254 = vld [vmem:[#allocation7 + $0x380] sm:$0xff]
    %v255 = vld [vmem:[#allocation7 + $0x388] sm:$0xff]
    %v256 = vld [vmem:[#allocation7 + $0x3c0] sm:$0xff]
    %v257 = vld [vmem:[#allocation7 + $0x3c8] sm:$0xff]
    %v258 = vld [vmem:[#allocation7 + $0x3d0] sm:$0xff]
    %v259 = vld [vmem:[#allocation7 + $0x3d8] sm:$0xff]
    %v260 = vld [vmem:[#allocation7 + $0x410] sm:$0xff]
    %v261 = vld [vmem:[#allocation7 + $0x418] sm:$0xff]
    %v262 = vld [vmem:[#allocation7 + $0x420] sm:$0xff]
    %v263 = vld [vmem:[#allocation7 + $0x428] sm:$0xff]
    %v264 = vld [vmem:[#allocation7 + $0x460] sm:$0xff]
    %v265 = vld [vmem:[#allocation7 + $0x468] sm:$0xff]
    %v266 = vld [vmem:[#allocation7 + $0x470] sm:$0xff]
    %v267 = vld [vmem:[#allocation7 + $0x478] sm:$0xff]
    %v268 = vld [vmem:[#allocation7 + $0x4b0] sm:$0xff]
    %v269 = vld [vmem:[#allocation7 + $0x4b8] sm:$0xff]
    %v270 = vld [vmem:[#allocation7 + $0x4c0] sm:$0xff]
    %v271 = vld [vmem:[#allocation7 + $0x4c8] sm:$0xff]
    %v272 = vld [vmem:[#allocation7 + $0x500] sm:$0xff]
    %v273 = vld [vmem:[#allocation7 + $0x508] sm:$0xff]
    %v274 = vld [vmem:[#allocation7 + $0x510] sm:$0xff]
    %v275 = vld [vmem:[#allocation7 + $0x518] sm:$0xff]
    %v276 = vld [vmem:[#allocation7 + $0x550] sm:$0xff]
    %v277 = vld [vmem:[#allocation7 + $0x558] sm:$0xff]
    %v278 = vld [vmem:[#allocation7 + $0x560] sm:$0xff]
    %v279 = vld [vmem:[#allocation7 + $0x568] sm:$0xff]
    %v280 = vld [vmem:[#allocation7 + $0x5a0] sm:$0xff]
    %v281 = vld [vmem:[#allocation7 + $0x5a8] sm:$0xff]
    %v282 = vld [vmem:[#allocation7 + $0x5b0] sm:$0xff]
    %v283 = vld [vmem:[#allocation7 + $0x5b8] sm:$0xff]
    %v284 = vld [vmem:[#allocation7 + $0x5f0] sm:$0xff]
    %v285 = vld [vmem:[#allocation7 + $0x5f8] sm:$0xff]
    %v286 = vld [vmem:[#allocation7 + $0x600] sm:$0xff]
    %v287 = vld [vmem:[#allocation7 + $0x608] sm:$0xff]
    %v288 = vld [vmem:[#allocation7 + $0x640] sm:$0xff]
    %v289 = vld [vmem:[#allocation7 + $0x648] sm:$0xff]
    %v290 = vld [vmem:[#allocation7 + $0x650] sm:$0xff]
    %v291 = vld [vmem:[#allocation7 + $0x658] sm:$0xff]
    %v292 = vld [vmem:[#allocation7 + $0x690] sm:$0xff]
    %v293 = vld [vmem:[#allocation7 + $0x698] sm:$0xff]
    %v294 = vld [vmem:[#allocation7 + $0x6a0] sm:$0xff]
    %v295 = vld [vmem:[#allocation7 + $0x6a8] sm:$0xff]
    %v296 = vld [vmem:[#allocation7 + $0x6e0] sm:$0xff]
    %v297 = vld [vmem:[#allocation7 + $0x6e8] sm:$0xff]
    %v298 = vld [vmem:[#allocation7 + $0x6f0] sm:$0xff]
    %v299 = vld [vmem:[#allocation7 + $0x6f8] sm:$0xff]
    %v300 = vld [vmem:[#allocation7 + $0x730] sm:$0xff]
    %v301 = vld [vmem:[#allocation7 + $0x738] sm:$0xff]
    %v302 = vld [vmem:[#allocation7 + $0x740] sm:$0xff]
    %v303 = vld [vmem:[#allocation7 + $0x748] sm:$0xff]
    %v304 = vld [vmem:[#allocation7 + $0x780] sm:$0xff]
    %v305 = vld [vmem:[#allocation7 + $0x788] sm:$0xff]
    %v306 = vld [vmem:[#allocation7 + $0x790] sm:$0xff]
    %v307 = vld [vmem:[#allocation7 + $0x798] sm:$0xff]
    %v308 = vld [vmem:[#allocation7 + $0x7d0] sm:$0xff]
    %v309 = vld [vmem:[#allocation7 + $0x7d8] sm:$0xff]
    %v310 = vld [vmem:[#allocation7 + $0x7e0] sm:$0xff]
    %v311 = vld [vmem:[#allocation7 + $0x7e8] sm:$0xff]
    %v312 = vld [vmem:[#allocation7 + $0x820] sm:$0xff]
    %v313 = vld [vmem:[#allocation7 + $0x828] sm:$0xff]
    %v314 = vld [vmem:[#allocation7 + $0x830] sm:$0xff]
    %v315 = vld [vmem:[#allocation7 + $0x838] sm:$0xff]
    %v316 = vld [vmem:[#allocation7 + $0x870] sm:$0xff]
    %v317 = vld [vmem:[#allocation7 + $0x878] sm:$0xff]
    %v318 = vld [vmem:[#allocation7 + $0x880] sm:$0xff]
    %v319 = vld [vmem:[#allocation7 + $0x888] sm:$0xff]
    %v320 = vld [vmem:[#allocation7 + $0x8c0] sm:$0xff]
    %v321 = vld [vmem:[#allocation7 + $0x8c8] sm:$0xff]
    %v322 = vld [vmem:[#allocation7 + $0x8d0] sm:$0xff]
    %v323 = vld [vmem:[#allocation7 + $0x8d8] sm:$0xff]
    %v324 = vld [vmem:[#allocation7 + $0x910] sm:$0xff]
    %v325 = vld [vmem:[#allocation7 + $0x918] sm:$0xff]
    %v326 = vld [vmem:[#allocation7 + $0x920] sm:$0xff]
    %v327 = vld [vmem:[#allocation7 + $0x928] sm:$0xff]
    %v328 = vld [vmem:[#allocation7 + $0x960] sm:$0xff]
    %v329 = vld [vmem:[#allocation7 + $0x968] sm:$0xff]
    %v330 = vld [vmem:[#allocation7 + $0x970] sm:$0xff]
    %v331 = vld [vmem:[#allocation7 + $0x978] sm:$0xff]
    %v332 = vld [vmem:[#allocation7 + $0x9b0] sm:$0xff]
    %v333 = vld [vmem:[#allocation7 + $0x9b8] sm:$0xff]
    %v334 = vld [vmem:[#allocation7 + $0x9c0] sm:$0xff]
    %v335 = vld [vmem:[#allocation7 + $0x9c8] sm:$0xff]
    %v336 = vld [vmem:[#allocation10] sm:$0xf]
    %v338 = vperm.slane %v336, 0
    %v339 = vperm.slane %v336, 1
    %v340 = vperm.slane %v336, 2
    %v341 = vperm.slane %v336, 3
    %347 = vst [vmem:[#allocation1] ss:$4 sm:$0xff] %v133
    %v348 = vld.sshfl [vmem:[#allocation1] sm:$0xff pattern:$0x73625140]
    %v349 = vld.sshfl [vmem:[#allocation1 + $0x8] sm:$0xff pattern:$0x73625140]
    %352 = vmatpush.msra.mxu0 %v268
    %353 = vmatpush.msra.mxu0 %v264
    %354 = vmatpush.msra.mxu0 %v260
    %355 = vmatpush.msra.mxu0 %v256
    %356 = vmatpush.msra.mxu0 %v252
    %357 = vmatpush.msra.mxu0 %v248
    %358 = vmatpush.msra.mxu0 %v244
    %359 = vmatpush.msra.mxu0 %v240
    %360 = vmatpush.msra.mxu0 %v236
    %361 = vmatpush.msra.mxu0 %v232
    %362 = vmatpush.msra.mxu0 %v228
    %363 = vmatpush.msra.mxu0 %v224
    %364 = vmatpush.msra.mxu0 %v220
    %365 = vmatpush.msra.mxu0 %v216
    %366 = vmatpush.msra.mxu0 %v212
    %367 = vmatpush.msra.mxu0 %v208
    %368 = vmatmul.f32.gmra.mxu0 %v348
    %v369 = vpop.f32.mrf.mxu0
    %v370 = vadd.f32 %v338, %v369
    %371 = vdwg.mxu0
    %372 = vmatpush.msra.mxu0 %v332
    %373 = vmatpush.msra.mxu0 %v328
    %374 = vmatpush.msra.mxu0 %v324
    %375 = vmatpush.msra.mxu0 %v320
    %376 = vmatpush.msra.mxu0 %v316
    %377 = vmatpush.msra.mxu0 %v312
    %378 = vmatpush.msra.mxu0 %v308
    %379 = vmatpush.msra.mxu0 %v304
    %380 = vmatpush.msra.mxu0 %v300
    %381 = vmatpush.msra.mxu0 %v296
    %382 = vmatpush.msra.mxu0 %v292
    %383 = vmatpush.msra.mxu0 %v288
    %384 = vmatpush.msra.mxu0 %v284
    %385 = vmatpush.msra.mxu0 %v280
    %386 = vmatpush.msra.mxu0 %v276
    %387 = vmatpush.msra.mxu0 %v272
    %388 = vmatmul.f32.gmra.mxu0 %v349
    %v389 = vpop.f32.mrf.mxu0
    %v390 = vadd.f32 %v370, %v389
    %391 = vdwg.mxu0
    %392 = vmatpush.msra.mxu0 %v269
    %393 = vmatpush.msra.mxu0 %v265
    %394 = vmatpush.msra.mxu0 %v261
    %395 = vmatpush.msra.mxu0 %v257
    %396 = vmatpush.msra.mxu0 %v253
    %397 = vmatpush.msra.mxu0 %v249
    %398 = vmatpush.msra.mxu0 %v245
    %399 = vmatpush.msra.mxu0 %v241
    %400 = vmatpush.msra.mxu0 %v237
    %401 = vmatpush.msra.mxu0 %v233
    %402 = vmatpush.msra.mxu0 %v229
    %403 = vmatpush.msra.mxu0 %v225
    %404 = vmatpush.msra.mxu0 %v221
    %405 = vmatpush.msra.mxu0 %v217
    %406 = vmatpush.msra.mxu0 %v213
    %407 = vmatpush.msra.mxu0 %v209
    %408 = vmatmul.f32.gmra.mxu0 %v348
    %v409 = vpop.f32.mrf.mxu0
    %v410 = vadd.f32 %v339, %v409
    %411 = vdwg.mxu0
    %412 = vmatpush.msra.mxu0 %v333
    %413 = vmatpush.msra.mxu0 %v329
    %414 = vmatpush.msra.mxu0 %v325
    %415 = vmatpush.msra.mxu0 %v321
    %416 = vmatpush.msra.mxu0 %v317
    %417 = vmatpush.msra.mxu0 %v313
    %418 = vmatpush.msra.mxu0 %v309
    %419 = vmatpush.msra.mxu0 %v305
    %420 = vmatpush.msra.mxu0 %v301
    %421 = vmatpush.msra.mxu0 %v297
    %422 = vmatpush.msra.mxu0 %v293
    %423 = vmatpush.msra.mxu0 %v289
    %424 = vmatpush.msra.mxu0 %v285
    %425 = vmatpush.msra.mxu0 %v281
    %426 = vmatpush.msra.mxu0 %v277
    %427 = vmatpush.msra.mxu0 %v273
    %428 = vmatmul.f32.gmra.mxu0 %v349
    %v429 = vpop.f32.mrf.mxu0
    %v430 = vadd.f32 %v410, %v429
    %431 = vdwg.mxu0
    %432 = vmatpush.msra.mxu0 %v270
    %433 = vmatpush.msra.mxu0 %v266
    %434 = vmatpush.msra.mxu0 %v262
    %435 = vmatpush.msra.mxu0 %v258
    %436 = vmatpush.msra.mxu0 %v254
    %437 = vmatpush.msra.mxu0 %v250
    %438 = vmatpush.msra.mxu0 %v246
    %439 = vmatpush.msra.mxu0 %v242
    %440 = vmatpush.msra.mxu0 %v238
    %441 = vmatpush.msra.mxu0 %v234
    %442 = vmatpush.msra.mxu0 %v230
    %443 = vmatpush.msra.mxu0 %v226
    %444 = vmatpush.msra.mxu0 %v222
    %445 = vmatpush.msra.mxu0 %v218
    %446 = vmatpush.msra.mxu0 %v214
    %447 = vmatpush.msra.mxu0 %v210
    %448 = vmatmul.f32.gmra.mxu0 %v348
    %v449 = vpop.f32.mrf.mxu0
    %v450 = vadd.f32 %v340, %v449
    %451 = vdwg.mxu0
    %452 = vmatpush.msra.mxu0 %v334
    %453 = vmatpush.msra.mxu0 %v330
    %454 = vmatpush.msra.mxu0 %v326
    %455 = vmatpush.msra.mxu0 %v322
    %456 = vmatpush.msra.mxu0 %v318
    %457 = vmatpush.msra.mxu0 %v314
    %458 = vmatpush.msra.mxu0 %v310
    %459 = vmatpush.msra.mxu0 %v306
    %460 = vmatpush.msra.mxu0 %v302
    %461 = vmatpush.msra.mxu0 %v298
    %462 = vmatpush.msra.mxu0 %v294
    %463 = vmatpush.msra.mxu0 %v290
    %464 = vmatpush.msra.mxu0 %v286
    %465 = vmatpush.msra.mxu0 %v282
    %466 = vmatpush.msra.mxu0 %v278
    %467 = vmatpush.msra.mxu0 %v274
    %468 = vmatmul.f32.gmra.mxu0 %v349
    %v469 = vpop.f32.mrf.mxu0
    %v470 = vadd.f32 %v450, %v469
    %471 = vdwg.mxu0
    %472 = vmatpush.msra.mxu0 %v271
    %473 = vmatpush.msra.mxu0 %v267
    %474 = vmatpush.msra.mxu0 %v263
    %475 = vmatpush.msra.mxu0 %v259
    %476 = vmatpush.msra.mxu0 %v255
    %477 = vmatpush.msra.mxu0 %v251
    %478 = vmatpush.msra.mxu0 %v247
    %479 = vmatpush.msra.mxu0 %v243
    %480 = vmatpush.msra.mxu0 %v239
    %481 = vmatpush.msra.mxu0 %v235
    %482 = vmatpush.msra.mxu0 %v231
    %483 = vmatpush.msra.mxu0 %v227
    %484 = vmatpush.msra.mxu0 %v223
    %485 = vmatpush.msra.mxu0 %v219
    %486 = vmatpush.msra.mxu0 %v215
    %487 = vmatpush.msra.mxu0 %v211
    %488 = vmatmul.f32.gmra.mxu0 %v348
    %v489 = vpop.f32.mrf.mxu0
    %v490 = vadd.f32 %v341, %v489
    %491 = vdwg.mxu0
    %492 = vmatpush.msra.mxu0 %v335
    %493 = vmatpush.msra.mxu0 %v331
    %494 = vmatpush.msra.mxu0 %v327
    %495 = vmatpush.msra.mxu0 %v323
    %496 = vmatpush.msra.mxu0 %v319
    %497 = vmatpush.msra.mxu0 %v315
    %498 = vmatpush.msra.mxu0 %v311
    %499 = vmatpush.msra.mxu0 %v307
    %500 = vmatpush.msra.mxu0 %v303
    %501 = vmatpush.msra.mxu0 %v299
    %502 = vmatpush.msra.mxu0 %v295
    %503 = vmatpush.msra.mxu0 %v291
    %504 = vmatpush.msra.mxu0 %v287
    %505 = vmatpush.msra.mxu0 %v283
    %506 = vmatpush.msra.mxu0 %v279
    %507 = vmatpush.msra.mxu0 %v275
    %508 = vmatmul.f32.gmra.mxu0 %v349
    %v509 = vpop.f32.mrf.mxu0
    %v510 = vadd.f32 %v490, %v509
    %511 = vdwg.mxu0
    %v516 = vrot.slane %v430, 7
    %v517 = vrot.slane %v470, 6
    %v518 = vrot.slane %v510, 5
    %vm519 = vcmask 1040384
    %v520 = vsel %vm519, %v390, %v516
    %vm521 = vcmask 1042434
    %v522 = vsel %vm521, %v517, %v518
    %vm523 = vcmask 1041408
    %v524 = vsel %vm523, %v520, %v522
    %vm525 = vcmask 1041409
    %v526 = vsel %vm525, %v390, %v516
    %vm527 = vcmask 1043459
    %v528 = vsel %vm527, %v517, %v518
    %vm529 = vcmask 1042433
    %v530 = vsel %vm529, %v526, %v528
    %v531 = vrot.slane %v530, 1
    %v532 = vperm.slane %v524, 0
    %v533 = vperm.slane %v524, 1
    %v534 = vperm.slane %v524, 2
    %v535 = vperm.slane %v524, 3
    %v536 = vperm.slane %v531, 0
    %v537 = vperm.slane %v531, 1
    %v538 = vperm.slane %v531, 2
    %v539 = vperm.slane %v531, 3
    %v549 = vrot.slane %v140, 1
    %v550 = vrot.slane %v140, 2
    %v551 = vrot.slane %v140, 3
    %v552 = vsel %vm519, %v140, %v549
    %v553 = vsel %vm521, %v550, %v551
    %v554 = vsel %vm523, %v552, %v553
    %v555 = vsel %vm525, %v140, %v549
    %v556 = vsel %vm527, %v550, %v551
    %v557 = vsel %vm529, %v555, %v556
    %v558 = vrot.slane %v557, 1
    %v559 = vperm.slane %v554, 0
    %v560 = vperm.slane %v554, 1
    %v561 = vperm.slane %v558, 0
    %v562 = vperm.slane %v558, 1
    %v567 = vld [vmem:[#allocation7 + $0x20] sm:$0xff]
    %v568 = vld [vmem:[#allocation7 + $0x28] sm:$0xff]
    %v569 = vld [vmem:[#allocation7 + $0x70] sm:$0xff]
    %v570 = vld [vmem:[#allocation7 + $0x78] sm:$0xff]
    %v571 = vld [vmem:[#allocation7 + $0xc0] sm:$0xff]
    %v572 = vld [vmem:[#allocation7 + $0xc8] sm:$0xff]
    %v573 = vld [vmem:[#allocation7 + $0x110] sm:$0xff]
    %v574 = vld [vmem:[#allocation7 + $0x118] sm:$0xff]
    %v575 = vld [vmem:[#allocation7 + $0x160] sm:$0xff]
    %v576 = vld [vmem:[#allocation7 + $0x168] sm:$0xff]
    %v577 = vld [vmem:[#allocation7 + $0x1b0] sm:$0xff]
    %v578 = vld [vmem:[#allocation7 + $0x1b8] sm:$0xff]
    %v579 = vld [vmem:[#allocation7 + $0x200] sm:$0xff]
    %v580 = vld [vmem:[#allocation7 + $0x208] sm:$0xff]
    %v581 = vld [vmem:[#allocation7 + $0x250] sm:$0xff]
    %v582 = vld [vmem:[#allocation7 + $0x258] sm:$0xff]
    %v583 = vld [vmem:[#allocation7 + $0x2a0] sm:$0xff]
    %v584 = vld [vmem:[#allocation7 + $0x2a8] sm:$0xff]
    %v585 = vld [vmem:[#allocation7 + $0x2f0] sm:$0xff]
    %v586 = vld [vmem:[#allocation7 + $0x2f8] sm:$0xff]
    %v587 = vld [vmem:[#allocation7 + $0x340] sm:$0xff]
    %v588 = vld [vmem:[#allocation7 + $0x348] sm:$0xff]
    %v589 = vld [vmem:[#allocation7 + $0x390] sm:$0xff]
    %v590 = vld [vmem:[#allocation7 + $0x398] sm:$0xff]
    %v591 = vld [vmem:[#allocation7 + $0x3e0] sm:$0xff]
    %v592 = vld [vmem:[#allocation7 + $0x3e8] sm:$0xff]
    %v593 = vld [vmem:[#allocation7 + $0x430] sm:$0xff]
    %v594 = vld [vmem:[#allocation7 + $0x438] sm:$0xff]
    %v595 = vld [vmem:[#allocation7 + $0x480] sm:$0xff]
    %v596 = vld [vmem:[#allocation7 + $0x488] sm:$0xff]
    %v597 = vld [vmem:[#allocation7 + $0x4d0] sm:$0xff]
    %v598 = vld [vmem:[#allocation7 + $0x4d8] sm:$0xff]
    %v599 = vld [vmem:[#allocation7 + $0x520] sm:$0xff]
    %v600 = vld [vmem:[#allocation7 + $0x528] sm:$0xff]
    %v601 = vld [vmem:[#allocation7 + $0x570] sm:$0xff]
    %v602 = vld [vmem:[#allocation7 + $0x578] sm:$0xff]
    %v603 = vld [vmem:[#allocation7 + $0x5c0] sm:$0xff]
    %v604 = vld [vmem:[#allocation7 + $0x5c8] sm:$0xff]
    %v605 = vld [vmem:[#allocation7 + $0x610] sm:$0xff]
    %v606 = vld [vmem:[#allocation7 + $0x618] sm:$0xff]
    %v607 = vld [vmem:[#allocation7 + $0x660] sm:$0xff]
    %v608 = vld [vmem:[#allocation7 + $0x668] sm:$0xff]
    %v609 = vld [vmem:[#allocation7 + $0x6b0] sm:$0xff]
    %v610 = vld [vmem:[#allocation7 + $0x6b8] sm:$0xff]
    %v611 = vld [vmem:[#allocation7 + $0x700] sm:$0xff]
    %v612 = vld [vmem:[#allocation7 + $0x708] sm:$0xff]
    %v613 = vld [vmem:[#allocation7 + $0x750] sm:$0xff]
    %v614 = vld [vmem:[#allocation7 + $0x758] sm:$0xff]
    %v615 = vld [vmem:[#allocation7 + $0x7a0] sm:$0xff]
    %v616 = vld [vmem:[#allocation7 + $0x7a8] sm:$0xff]
    %v617 = vld [vmem:[#allocation7 + $0x7f0] sm:$0xff]
    %v618 = vld [vmem:[#allocation7 + $0x7f8] sm:$0xff]
    %v619 = vld [vmem:[#allocation7 + $0x840] sm:$0xff]
    %v620 = vld [vmem:[#allocation7 + $0x848] sm:$0xff]
    %v621 = vld [vmem:[#allocation7 + $0x890] sm:$0xff]
    %v622 = vld [vmem:[#allocation7 + $0x898] sm:$0xff]
    %v623 = vld [vmem:[#allocation7 + $0x8e0] sm:$0xff]
    %v624 = vld [vmem:[#allocation7 + $0x8e8] sm:$0xff]
    %v625 = vld [vmem:[#allocation7 + $0x930] sm:$0xff]
    %v626 = vld [vmem:[#allocation7 + $0x938] sm:$0xff]
    %v627 = vld [vmem:[#allocation7 + $0x980] sm:$0xff]
    %v628 = vld [vmem:[#allocation7 + $0x988] sm:$0xff]
    %v629 = vld [vmem:[#allocation7 + $0x9d0] sm:$0xff]
    %v630 = vld [vmem:[#allocation7 + $0x9d8] sm:$0xff]
    %v631 = vld [vmem:[#allocation10 + $0x4] sm:$0x3]
    %v633 = vperm.slane %v631, 0
    %v634 = vperm.slane %v631, 1
    %637 = vmatpush.msra.mxu0 %v597
    %638 = vmatpush.msra.mxu0 %v595
    %639 = vmatpush.msra.mxu0 %v593
    %640 = vmatpush.msra.mxu0 %v591
    %641 = vmatpush.msra.mxu0 %v589
    %642 = vmatpush.msra.mxu0 %v587
    %643 = vmatpush.msra.mxu0 %v585
    %644 = vmatpush.msra.mxu0 %v583
    %645 = vmatpush.msra.mxu0 %v581
    %646 = vmatpush.msra.mxu0 %v579
    %647 = vmatpush.msra.mxu0 %v577
    %648 = vmatpush.msra.mxu0 %v575
    %649 = vmatpush.msra.mxu0 %v573
    %650 = vmatpush.msra.mxu0 %v571
    %651 = vmatpush.msra.mxu0 %v569
    %652 = vmatpush.msra.mxu0 %v567
    %653 = vmatmul.f32.gmra.mxu0 %v134
    %v654 = vpop.f32.mrf.mxu0
    %v655 = vadd.f32 %v633, %v654
    %656 = vmatmul.f32.gmra.mxu0 %v136
    %v657 = vpop.f32.mrf.mxu0
    %v658 = vadd.f32 %v633, %v657
    %659 = vdwg.mxu0
    %660 = vmatpush.msra.mxu0 %v629
    %661 = vmatpush.msra.mxu0 %v627
    %662 = vmatpush.msra.mxu0 %v625
    %663 = vmatpush.msra.mxu0 %v623
    %664 = vmatpush.msra.mxu0 %v621
    %665 = vmatpush.msra.mxu0 %v619
    %666 = vmatpush.msra.mxu0 %v617
    %667 = vmatpush.msra.mxu0 %v615
    %668 = vmatpush.msra.mxu0 %v613
    %669 = vmatpush.msra.mxu0 %v611
    %670 = vmatpush.msra.mxu0 %v609
    %671 = vmatpush.msra.mxu0 %v607
    %672 = vmatpush.msra.mxu0 %v605
    %673 = vmatpush.msra.mxu0 %v603
    %674 = vmatpush.msra.mxu0 %v601
    %675 = vmatpush.msra.mxu0 %v599
    %676 = vmatmul.f32.gmra.mxu0 %v135
    %v677 = vpop.f32.mrf.mxu0
    %v678 = vadd.f32 %v655, %v677
    %679 = vmatmul.f32.gmra.mxu0 %v137
    %v680 = vpop.f32.mrf.mxu0
    %v681 = vadd.f32 %v658, %v680
    %682 = vdwg.mxu0
    %683 = vmatpush.msra.mxu0 %v598
    %684 = vmatpush.msra.mxu0 %v596
    %685 = vmatpush.msra.mxu0 %v594
    %686 = vmatpush.msra.mxu0 %v592
    %687 = vmatpush.msra.mxu0 %v590
    %688 = vmatpush.msra.mxu0 %v588
    %689 = vmatpush.msra.mxu0 %v586
    %690 = vmatpush.msra.mxu0 %v584
    %691 = vmatpush.msra.mxu0 %v582
    %692 = vmatpush.msra.mxu0 %v580
    %693 = vmatpush.msra.mxu0 %v578
    %694 = vmatpush.msra.mxu0 %v576
    %695 = vmatpush.msra.mxu0 %v574
    %696 = vmatpush.msra.mxu0 %v572
    %697 = vmatpush.msra.mxu0 %v570
    %698 = vmatpush.msra.mxu0 %v568
    %699 = vmatmul.f32.gmra.mxu0 %v134
    %v700 = vpop.f32.mrf.mxu0
    %v701 = vadd.f32 %v634, %v700
    %702 = vmatmul.f32.gmra.mxu0 %v136
    %v703 = vpop.f32.mrf.mxu0
    %v704 = vadd.f32 %v634, %v703
    %705 = vdwg.mxu0
    %706 = vmatpush.msra.mxu0 %v630
    %707 = vmatpush.msra.mxu0 %v628
    %708 = vmatpush.msra.mxu0 %v626
    %709 = vmatpush.msra.mxu0 %v624
    %710 = vmatpush.msra.mxu0 %v622
    %711 = vmatpush.msra.mxu0 %v620
    %712 = vmatpush.msra.mxu0 %v618
    %713 = vmatpush.msra.mxu0 %v616
    %714 = vmatpush.msra.mxu0 %v614
    %715 = vmatpush.msra.mxu0 %v612
    %716 = vmatpush.msra.mxu0 %v610
    %717 = vmatpush.msra.mxu0 %v608
    %718 = vmatpush.msra.mxu0 %v606
    %719 = vmatpush.msra.mxu0 %v604
    %720 = vmatpush.msra.mxu0 %v602
    %721 = vmatpush.msra.mxu0 %v600
    %722 = vmatmul.f32.gmra.mxu0 %v135
    %v723 = vpop.f32.mrf.mxu0
    %v724 = vadd.f32 %v701, %v723
    %725 = vmatmul.f32.gmra.mxu0 %v137
    %v726 = vpop.f32.mrf.mxu0
    %v727 = vadd.f32 %v704, %v726
    %728 = vdwg.mxu0
    %v729 = vmul.f32 %v180, %v532
    %v730 = vmul.f32 %v203, %v533
    %v731 = vmul.f32 %v183, %v536
    %v732 = vmul.f32 %v206, %v537
    %v733 = vmul.f32 %v729, %v678
    %v734 = vmul.f32 %v730, %v724
    %v735 = vmul.f32 %v731, %v681
    %v736 = vmul.f32 %v732, %v727
    %v737 = vld [vmem:[#allocation7 + $0x30] sm:$0xff]
    %v738 = vld [vmem:[#allocation7 + $0x38] sm:$0xff]
    %v739 = vld [vmem:[#allocation7 + $0x40] sm:$0xff]
    %v740 = vld [vmem:[#allocation7 + $0x48] sm:$0xff]
    %v741 = vld [vmem:[#allocation7 + $0x80] sm:$0xff]
    %v742 = vld [vmem:[#allocation7 + $0x88] sm:$0xff]
    %v743 = vld [vmem:[#allocation7 + $0x90] sm:$0xff]
    %v744 = vld [vmem:[#allocation7 + $0x98] sm:$0xff]
    %v745 = vld [vmem:[#allocation7 + $0xd0] sm:$0xff]
    %v746 = vld [vmem:[#allocation7 + $0xd8] sm:$0xff]
    %v747 = vld [vmem:[#allocation7 + $0xe0] sm:$0xff]
    %v748 = vld [vmem:[#allocation7 + $0xe8] sm:$0xff]
    %v749 = vld [vmem:[#allocation7 + $0x120] sm:$0xff]
    %v750 = vld [vmem:[#allocation7 + $0x128] sm:$0xff]
    %v751 = vld [vmem:[#allocation7 + $0x130] sm:$0xff]
    %v752 = vld [vmem:[#allocation7 + $0x138] sm:$0xff]
    %v753 = vld [vmem:[#allocation7 + $0x170] sm:$0xff]
    %v754 = vld [vmem:[#allocation7 + $0x178] sm:$0xff]
    %v755 = vld [vmem:[#allocation7 + $0x180] sm:$0xff]
    %v756 = vld [vmem:[#allocation7 + $0x188] sm:$0xff]
    %v757 = vld [vmem:[#allocation7 + $0x1c0] sm:$0xff]
    %v758 = vld [vmem:[#allocation7 + $0x1c8] sm:$0xff]
    %v759 = vld [vmem:[#allocation7 + $0x1d0] sm:$0xff]
    %v760 = vld [vmem:[#allocation7 + $0x1d8] sm:$0xff]
    %v761 = vld [vmem:[#allocation7 + $0x210] sm:$0xff]
    %v762 = vld [vmem:[#allocation7 + $0x218] sm:$0xff]
    %v763 = vld [vmem:[#allocation7 + $0x220] sm:$0xff]
    %v764 = vld [vmem:[#allocation7 + $0x228] sm:$0xff]
    %v765 = vld [vmem:[#allocation7 + $0x260] sm:$0xff]
    %v766 = vld [vmem:[#allocation7 + $0x268] sm:$0xff]
    %v767 = vld [vmem:[#allocation7 + $0x270] sm:$0xff]
    %v768 = vld [vmem:[#allocation7 + $0x278] sm:$0xff]
    %v769 = vld [vmem:[#allocation7 + $0x2b0] sm:$0xff]
    %v770 = vld [vmem:[#allocation7 + $0x2b8] sm:$0xff]
    %v771 = vld [vmem:[#allocation7 + $0x2c0] sm:$0xff]
    %v772 = vld [vmem:[#allocation7 + $0x2c8] sm:$0xff]
    %v773 = vld [vmem:[#allocation7 + $0x300] sm:$0xff]
    %v774 = vld [vmem:[#allocation7 + $0x308] sm:$0xff]
    %v775 = vld [vmem:[#allocation7 + $0x310] sm:$0xff]
    %v776 = vld [vmem:[#allocation7 + $0x318] sm:$0xff]
    %v777 = vld [vmem:[#allocation7 + $0x350] sm:$0xff]
    %v778 = vld [vmem:[#allocation7 + $0x358] sm:$0xff]
    %v779 = vld [vmem:[#allocation7 + $0x360] sm:$0xff]
    %v780 = vld [vmem:[#allocation7 + $0x368] sm:$0xff]
    %v781 = vld [vmem:[#allocation7 + $0x3a0] sm:$0xff]
    %v782 = vld [vmem:[#allocation7 + $0x3a8] sm:$0xff]
    %v783 = vld [vmem:[#allocation7 + $0x3b0] sm:$0xff]
    %v784 = vld [vmem:[#allocation7 + $0x3b8] sm:$0xff]
    %v785 = vld [vmem:[#allocation7 + $0x3f0] sm:$0xff]
    %v786 = vld [vmem:[#allocation7 + $0x3f8] sm:$0xff]
    %v787 = vld [vmem:[#allocation7 + $0x400] sm:$0xff]
    %v788 = vld [vmem:[#allocation7 + $0x408] sm:$0xff]
    %v789 = vld [vmem:[#allocation7 + $0x440] sm:$0xff]
    %v790 = vld [vmem:[#allocation7 + $0x448] sm:$0xff]
    %v791 = vld [vmem:[#allocation7 + $0x450] sm:$0xff]
    %v792 = vld [vmem:[#allocation7 + $0x458] sm:$0xff]
    %v793 = vld [vmem:[#allocation7 + $0x490] sm:$0xff]
    %v794 = vld [vmem:[#allocation7 + $0x498] sm:$0xff]
    %v795 = vld [vmem:[#allocation7 + $0x4a0] sm:$0xff]
    %v796 = vld [vmem:[#allocation7 + $0x4a8] sm:$0xff]
    %v797 = vld [vmem:[#allocation7 + $0x4e0] sm:$0xff]
    %v798 = vld [vmem:[#allocation7 + $0x4e8] sm:$0xff]
    %v799 = vld [vmem:[#allocation7 + $0x4f0] sm:$0xff]
    %v800 = vld [vmem:[#allocation7 + $0x4f8] sm:$0xff]
    %v801 = vld [vmem:[#allocation7 + $0x530] sm:$0xff]
    %v802 = vld [vmem:[#allocation7 + $0x538] sm:$0xff]
    %v803 = vld [vmem:[#allocation7 + $0x540] sm:$0xff]
    %v804 = vld [vmem:[#allocation7 + $0x548] sm:$0xff]
    %v805 = vld [vmem:[#allocation7 + $0x580] sm:$0xff]
    %v806 = vld [vmem:[#allocation7 + $0x588] sm:$0xff]
    %v807 = vld [vmem:[#allocation7 + $0x590] sm:$0xff]
    %v808 = vld [vmem:[#allocation7 + $0x598] sm:$0xff]
    %v809 = vld [vmem:[#allocation7 + $0x5d0] sm:$0xff]
    %v810 = vld [vmem:[#allocation7 + $0x5d8] sm:$0xff]
    %v811 = vld [vmem:[#allocation7 + $0x5e0] sm:$0xff]
    %v812 = vld [vmem:[#allocation7 + $0x5e8] sm:$0xff]
    %v813 = vld [vmem:[#allocation7 + $0x620] sm:$0xff]
    %v814 = vld [vmem:[#allocation7 + $0x628] sm:$0xff]
    %v815 = vld [vmem:[#allocation7 + $0x630] sm:$0xff]
    %v816 = vld [vmem:[#allocation7 + $0x638] sm:$0xff]
    %v817 = vld [vmem:[#allocation7 + $0x670] sm:$0xff]
    %v818 = vld [vmem:[#allocation7 + $0x678] sm:$0xff]
    %v819 = vld [vmem:[#allocation7 + $0x680] sm:$0xff]
    %v820 = vld [vmem:[#allocation7 + $0x688] sm:$0xff]
    %v821 = vld [vmem:[#allocation7 + $0x6c0] sm:$0xff]
    %v822 = vld [vmem:[#allocation7 + $0x6c8] sm:$0xff]
    %v823 = vld [vmem:[#allocation7 + $0x6d0] sm:$0xff]
    %v824 = vld [vmem:[#allocation7 + $0x6d8] sm:$0xff]
    %v825 = vld [vmem:[#allocation7 + $0x710] sm:$0xff]
    %v826 = vld [vmem:[#allocation7 + $0x718] sm:$0xff]
    %v827 = vld [vmem:[#allocation7 + $0x720] sm:$0xff]
    %v828 = vld [vmem:[#allocation7 + $0x728] sm:$0xff]
    %v829 = vld [vmem:[#allocation7 + $0x760] sm:$0xff]
    %v830 = vld [vmem:[#allocation7 + $0x768] sm:$0xff]
    %v831 = vld [vmem:[#allocation7 + $0x770] sm:$0xff]
    %v832 = vld [vmem:[#allocation7 + $0x778] sm:$0xff]
    %v833 = vld [vmem:[#allocation7 + $0x7b0] sm:$0xff]
    %v834 = vld [vmem:[#allocation7 + $0x7b8] sm:$0xff]
    %v835 = vld [vmem:[#allocation7 + $0x7c0] sm:$0xff]
    %v836 = vld [vmem:[#allocation7 + $0x7c8] sm:$0xff]
    %v837 = vld [vmem:[#allocation7 + $0x800] sm:$0xff]
    %v838 = vld [vmem:[#allocation7 + $0x808] sm:$0xff]
    %v839 = vld [vmem:[#allocation7 + $0x810] sm:$0xff]
    %v840 = vld [vmem:[#allocation7 + $0x818] sm:$0xff]
    %v841 = vld [vmem:[#allocation7 + $0x850] sm:$0xff]
    %v842 = vld [vmem:[#allocation7 + $0x858] sm:$0xff]
    %v843 = vld [vmem:[#allocation7 + $0x860] sm:$0xff]
    %v844 = vld [vmem:[#allocation7 + $0x868] sm:$0xff]
    %v845 = vld [vmem:[#allocation7 + $0x8a0] sm:$0xff]
    %v846 = vld [vmem:[#allocation7 + $0x8a8] sm:$0xff]
    %v847 = vld [vmem:[#allocation7 + $0x8b0] sm:$0xff]
    %v848 = vld [vmem:[#allocation7 + $0x8b8] sm:$0xff]
    %v849 = vld [vmem:[#allocation7 + $0x8f0] sm:$0xff]
    %v850 = vld [vmem:[#allocation7 + $0x8f8] sm:$0xff]
    %v851 = vld [vmem:[#allocation7 + $0x900] sm:$0xff]
    %v852 = vld [vmem:[#allocation7 + $0x908] sm:$0xff]
    %v853 = vld [vmem:[#allocation7 + $0x940] sm:$0xff]
    %v854 = vld [vmem:[#allocation7 + $0x948] sm:$0xff]
    %v855 = vld [vmem:[#allocation7 + $0x950] sm:$0xff]
    %v856 = vld [vmem:[#allocation7 + $0x958] sm:$0xff]
    %v857 = vld [vmem:[#allocation7 + $0x990] sm:$0xff]
    %v858 = vld [vmem:[#allocation7 + $0x998] sm:$0xff]
    %v859 = vld [vmem:[#allocation7 + $0x9a0] sm:$0xff]
    %v860 = vld [vmem:[#allocation7 + $0x9a8] sm:$0xff]
    %v861 = vld [vmem:[#allocation7 + $0x9e0] sm:$0xff]
    %v862 = vld [vmem:[#allocation7 + $0x9e8] sm:$0xff]
    %v863 = vld [vmem:[#allocation7 + $0x9f0] sm:$0xff]
    %v864 = vld [vmem:[#allocation7 + $0x9f8] sm:$0xff]
    %865 = vmatpush.msra.mxu0 %v797
    %866 = vmatpush.msra.mxu0 %v793
    %867 = vmatpush.msra.mxu0 %v789
    %868 = vmatpush.msra.mxu0 %v785
    %869 = vmatpush.msra.mxu0 %v781
    %870 = vmatpush.msra.mxu0 %v777
    %871 = vmatpush.msra.mxu0 %v773
    %872 = vmatpush.msra.mxu0 %v769
    %873 = vmatpush.msra.mxu0 %v765
    %874 = vmatpush.msra.mxu0 %v761
    %875 = vmatpush.msra.mxu0 %v757
    %876 = vmatpush.msra.mxu0 %v753
    %877 = vmatpush.msra.mxu0 %v749
    %878 = vmatpush.msra.mxu0 %v745
    %879 = vmatpush.msra.mxu0 %v741
    %880 = vmatpush.msra.mxu0 %v737
    %881 = vmatmul.f32.gmra.mxu0 %v733
    %v882 = vpop.f32.mrf.mxu0
    %v883 = vadd.f32 0.0, %v882
    %884 = vmatmul.f32.gmra.mxu0 %v735
    %v885 = vpop.f32.mrf.mxu0
    %v886 = vadd.f32 0.0, %v885
    %887 = vdwg.mxu0
    %888 = vmatpush.msra.mxu0 %v861
    %889 = vmatpush.msra.mxu0 %v857
    %890 = vmatpush.msra.mxu0 %v853
    %891 = vmatpush.msra.mxu0 %v849
    %892 = vmatpush.msra.mxu0 %v845
    %893 = vmatpush.msra.mxu0 %v841
    %894 = vmatpush.msra.mxu0 %v837
    %895 = vmatpush.msra.mxu0 %v833
    %896 = vmatpush.msra.mxu0 %v829
    %897 = vmatpush.msra.mxu0 %v825
    %898 = vmatpush.msra.mxu0 %v821
    %899 = vmatpush.msra.mxu0 %v817
    %900 = vmatpush.msra.mxu0 %v813
    %901 = vmatpush.msra.mxu0 %v809
    %902 = vmatpush.msra.mxu0 %v805
    %903 = vmatpush.msra.mxu0 %v801
    %904 = vmatmul.f32.gmra.mxu0 %v734
    %v905 = vpop.f32.mrf.mxu0
    %v906 = vadd.f32 %v883, %v905
    %907 = vmatmul.f32.gmra.mxu0 %v736
    %v908 = vpop.f32.mrf.mxu0
    %v909 = vadd.f32 %v886, %v908
    %910 = vdwg.mxu0
    %911 = vmatpush.msra.mxu0 %v798
    %912 = vmatpush.msra.mxu0 %v794
    %913 = vmatpush.msra.mxu0 %v790
    %914 = vmatpush.msra.mxu0 %v786
    %915 = vmatpush.msra.mxu0 %v782
    %916 = vmatpush.msra.mxu0 %v778
    %917 = vmatpush.msra.mxu0 %v774
    %918 = vmatpush.msra.mxu0 %v770
    %919 = vmatpush.msra.mxu0 %v766
    %920 = vmatpush.msra.mxu0 %v762
    %921 = vmatpush.msra.mxu0 %v758
    %922 = vmatpush.msra.mxu0 %v754
    %923 = vmatpush.msra.mxu0 %v750
    %924 = vmatpush.msra.mxu0 %v746
    %925 = vmatpush.msra.mxu0 %v742
    %926 = vmatpush.msra.mxu0 %v738
    %927 = vmatmul.f32.gmra.mxu0 %v733
    %v928 = vpop.f32.mrf.mxu0
    %v929 = vadd.f32 0.0, %v928
    %930 = vmatmul.f32.gmra.mxu0 %v735
    %v931 = vpop.f32.mrf.mxu0
    %v932 = vadd.f32 0.0, %v931
    %933 = vdwg.mxu0
    %934 = vmatpush.msra.mxu0 %v862
    %935 = vmatpush.msra.mxu0 %v858
    %936 = vmatpush.msra.mxu0 %v854
    %937 = vmatpush.msra.mxu0 %v850
    %938 = vmatpush.msra.mxu0 %v846
    %939 = vmatpush.msra.mxu0 %v842
    %940 = vmatpush.msra.mxu0 %v838
    %941 = vmatpush.msra.mxu0 %v834
    %942 = vmatpush.msra.mxu0 %v830
    %943 = vmatpush.msra.mxu0 %v826
    %944 = vmatpush.msra.mxu0 %v822
    %945 = vmatpush.msra.mxu0 %v818
    %946 = vmatpush.msra.mxu0 %v814
    %947 = vmatpush.msra.mxu0 %v810
    %948 = vmatpush.msra.mxu0 %v806
    %949 = vmatpush.msra.mxu0 %v802
    %950 = vmatmul.f32.gmra.mxu0 %v734
    %v951 = vpop.f32.mrf.mxu0
    %v952 = vadd.f32 %v929, %v951
    %953 = vmatmul.f32.gmra.mxu0 %v736
    %v954 = vpop.f32.mrf.mxu0
    %v955 = vadd.f32 %v932, %v954
    %956 = vdwg.mxu0
    %957 = vmatpush.msra.mxu0 %v799
    %958 = vmatpush.msra.mxu0 %v795
    %959 = vmatpush.msra.mxu0 %v791
    %960 = vmatpush.msra.mxu0 %v787
    %961 = vmatpush.msra.mxu0 %v783
    %962 = vmatpush.msra.mxu0 %v779
    %963 = vmatpush.msra.mxu0 %v775
    %964 = vmatpush.msra.mxu0 %v771
    %965 = vmatpush.msra.mxu0 %v767
    %966 = vmatpush.msra.mxu0 %v763
    %967 = vmatpush.msra.mxu0 %v759
    %968 = vmatpush.msra.mxu0 %v755
    %969 = vmatpush.msra.mxu0 %v751
    %970 = vmatpush.msra.mxu0 %v747
    %971 = vmatpush.msra.mxu0 %v743
    %972 = vmatpush.msra.mxu0 %v739
    %973 = vmatmul.f32.gmra.mxu0 %v733
    %v974 = vpop.f32.mrf.mxu0
    %v975 = vadd.f32 0.0, %v974
    %976 = vmatmul.f32.gmra.mxu0 %v735
    %v977 = vpop.f32.mrf.mxu0
    %v978 = vadd.f32 0.0, %v977
    %979 = vdwg.mxu0
    %980 = vmatpush.msra.mxu0 %v863
    %981 = vmatpush.msra.mxu0 %v859
    %982 = vmatpush.msra.mxu0 %v855
    %983 = vmatpush.msra.mxu0 %v851
    %984 = vmatpush.msra.mxu0 %v847
    %985 = vmatpush.msra.mxu0 %v843
    %986 = vmatpush.msra.mxu0 %v839
    %987 = vmatpush.msra.mxu0 %v835
    %988 = vmatpush.msra.mxu0 %v831
    %989 = vmatpush.msra.mxu0 %v827
    %990 = vmatpush.msra.mxu0 %v823
    %991 = vmatpush.msra.mxu0 %v819
    %992 = vmatpush.msra.mxu0 %v815
    %993 = vmatpush.msra.mxu0 %v811
    %994 = vmatpush.msra.mxu0 %v807
    %995 = vmatpush.msra.mxu0 %v803
    %996 = vmatmul.f32.gmra.mxu0 %v734
    %v997 = vpop.f32.mrf.mxu0
    %v998 = vadd.f32 %v975, %v997
    %999 = vmatmul.f32.gmra.mxu0 %v736
    %v1000 = vpop.f32.mrf.mxu0
    %v1001 = vadd.f32 %v978, %v1000
    %1002 = vdwg.mxu0
    %1003 = vmatpush.msra.mxu0 %v800
    %1004 = vmatpush.msra.mxu0 %v796
    %1005 = vmatpush.msra.mxu0 %v792
    %1006 = vmatpush.msra.mxu0 %v788
    %1007 = vmatpush.msra.mxu0 %v784
    %1008 = vmatpush.msra.mxu0 %v780
    %1009 = vmatpush.msra.mxu0 %v776
    %1010 = vmatpush.msra.mxu0 %v772
    %1011 = vmatpush.msra.mxu0 %v768
    %1012 = vmatpush.msra.mxu0 %v764
    %1013 = vmatpush.msra.mxu0 %v760
    %1014 = vmatpush.msra.mxu0 %v756
    %1015 = vmatpush.msra.mxu0 %v752
    %1016 = vmatpush.msra.mxu0 %v748
    %1017 = vmatpush.msra.mxu0 %v744
    %1018 = vmatpush.msra.mxu0 %v740
    %1019 = vmatmul.f32.gmra.mxu0 %v733
    %v1020 = vpop.f32.mrf.mxu0
    %v1021 = vadd.f32 0.0, %v1020
    %1022 = vmatmul.f32.gmra.mxu0 %v735
    %v1023 = vpop.f32.mrf.mxu0
    %v1024 = vadd.f32 0.0, %v1023
    %1025 = vdwg.mxu0
    %1026 = vmatpush.msra.mxu0 %v864
    %1027 = vmatpush.msra.mxu0 %v860
    %1028 = vmatpush.msra.mxu0 %v856
    %1029 = vmatpush.msra.mxu0 %v852
    %1030 = vmatpush.msra.mxu0 %v848
    %1031 = vmatpush.msra.mxu0 %v844
    %1032 = vmatpush.msra.mxu0 %v840
    %1033 = vmatpush.msra.mxu0 %v836
    %1034 = vmatpush.msra.mxu0 %v832
    %1035 = vmatpush.msra.mxu0 %v828
    %1036 = vmatpush.msra.mxu0 %v824
    %1037 = vmatpush.msra.mxu0 %v820
    %1038 = vmatpush.msra.mxu0 %v816
    %1039 = vmatpush.msra.mxu0 %v812
    %1040 = vmatpush.msra.mxu0 %v808
    %1041 = vmatpush.msra.mxu0 %v804
    %1042 = vmatmul.f32.gmra.mxu0 %v734
    %v1043 = vpop.f32.mrf.mxu0
    %v1044 = vadd.f32 %v1021, %v1043
    %1045 = vmatmul.f32.gmra.mxu0 %v736
    %v1046 = vpop.f32.mrf.mxu0
    %v1047 = vadd.f32 %v1024, %v1046
    %1048 = vdwg.mxu0
    %v1049 = vld [vmem:[#allocation10 + $0x8] sm:$0x3]
    %v1051 = vperm.slane %v1049, 0
    %v1052 = vperm.slane %v1049, 1
    %v1055 = vadd.f32 %v998, %v1051
    %v1056 = vadd.f32 %v1044, %v1052
    %v1057 = vadd.f32 %v1001, %v1051
    %v1058 = vadd.f32 %v1047, %v1052
    %vm1059 = vcmp.gt.f32.partialorder %v559, 0.0
    %vm1060 = vcmp.gt.f32.partialorder %v560, 0.0
    %vm1061 = vcmp.gt.f32.partialorder %v561, 0.0
    %vm1062 = vcmp.gt.f32.partialorder %v562, 0.0
    %v1063 = vsel %vm1059, %v906, -1e+09
    %v1064 = vsel %vm1060, %v952, -1e+09
    %v1065 = vsel %vm1061, %v909, -1e+09
    %v1066 = vsel %vm1062, %v955, -1e+09
    %v1067 = vmax.f32 %v1063, %v1064
    %1068 = vmax.xlane.f32.xlu0 %v1067
    %v1069 = vpop.xlane.xlu0 %1068
    %v1070 = vmax.f32 %v1065, %v1066
    %1071 = vmax.xlane.f32.xlu0 %v1070
    %v1072 = vpop.xlane.xlu0 %1071
    %v1073 = vsub.f32 %v1063, %v1069
    %v1074 = vsub.f32 %v1064, %v1069
    %v1075 = vsub.f32 %v1065, %v1072
    %v1076 = vsub.f32 %v1066, %v1072
    %v1077 = vmul.f32 %v1073, 1.442695
    %v1078 = vpow.pop %v1077
    %v1079 = vmul.f32 %v1074, 1.442695
    %v1080 = vpow.pop %v1079
    %v1081 = vmul.f32 %v1075, 1.442695
    %v1082 = vpow.pop %v1081
    %v1083 = vmul.f32 %v1076, 1.442695
    %v1084 = vpow.pop %v1083
    %v1085 = vsel %vm1059, %v1078, 0.0
    %v1086 = vsel %vm1060, %v1080, 0.0
    %v1087 = vsel %vm1061, %v1082, 0.0
    %v1088 = vsel %vm1062, %v1084, 0.0
    %v1089 = vmul.f32 %v1085, %v534
    %v1090 = vmul.f32 %v1086, %v535
    %v1091 = vmul.f32 %v1087, %v538
    %v1092 = vmul.f32 %v1088, %v539
    %v1093 = vld [vmem:[%s7] sm:$0xff]
    %v1094 = vld [vmem:[%s7 + $0x8] sm:$0xff]
    %v1095 = vld [vmem:[%s7 + $0x10] sm:$0xff]
    %v1096 = vld [vmem:[%s7 + $0x18] sm:$0xff]
    %v1097 = vld [vmem:[%s7 + $0x20] sm:$0xff]
    %v1098 = vld [vmem:[%s7 + $0x28] sm:$0xff]
    %v1099 = vld [vmem:[%s7 + $0x30] sm:$0xff]
    %v1100 = vld [vmem:[%s7 + $0x38] sm:$0xff]
    %v1101 = vld [vmem:[%s7 + $0x40] sm:$0xff]
    %v1102 = vld [vmem:[%s7 + $0x48] sm:$0xff]
    %v1103 = vld [vmem:[%s7 + $0x50] sm:$0xff]
    %v1104 = vld [vmem:[%s7 + $0x58] sm:$0xff]
    %v1105 = vld [vmem:[%s7 + $0x60] sm:$0xff]
    %v1106 = vld [vmem:[%s7 + $0x68] sm:$0xff]
    %v1107 = vld [vmem:[%s7 + $0x70] sm:$0xff]
    %v1108 = vld [vmem:[%s7 + $0x78] sm:$0xff]
    %v1109 = vld [vmem:[%s7 + $0x80] sm:$0xff]
    %v1110 = vld [vmem:[%s7 + $0x88] sm:$0xff]
    %v1111 = vld [vmem:[%s7 + $0x90] sm:$0xff]
    %v1112 = vld [vmem:[%s7 + $0x98] sm:$0xff]
    %v1113 = vld [vmem:[%s7 + $0xa0] sm:$0xff]
    %v1114 = vld [vmem:[%s7 + $0xa8] sm:$0xff]
    %v1115 = vld [vmem:[%s7 + $0xb0] sm:$0xff]
    %v1116 = vld [vmem:[%s7 + $0xb8] sm:$0xff]
    %v1117 = vld [vmem:[%s7 + $0xc0] sm:$0xff]
    %v1118 = vld [vmem:[%s7 + $0xc8] sm:$0xff]
    %v1119 = vld [vmem:[%s7 + $0xd0] sm:$0xff]
    %v1120 = vld [vmem:[%s7 + $0xd8] sm:$0xff]
    %v1121 = vld [vmem:[%s7 + $0xe0] sm:$0xff]
    %v1122 = vld [vmem:[%s7 + $0xe8] sm:$0xff]
    %v1123 = vld [vmem:[%s7 + $0xf0] sm:$0xff]
    %v1124 = vld [vmem:[%s7 + $0xf8] sm:$0xff]
    %1125 = vmatpush.msra.mxu0 %v1108
    %1126 = vmatpush.msra.mxu0 %v1107
    %1127 = vmatpush.msra.mxu0 %v1106
    %1128 = vmatpush.msra.mxu0 %v1105
    %1129 = vmatpush.msra.mxu0 %v1104
    %1130 = vmatpush.msra.mxu0 %v1103
    %1131 = vmatpush.msra.mxu0 %v1102
    %1132 = vmatpush.msra.mxu0 %v1101
    %1133 = vmatpush.msra.mxu0 %v1100
    %1134 = vmatpush.msra.mxu0 %v1099
    %1135 = vmatpush.msra.mxu0 %v1098
    %1136 = vmatpush.msra.mxu0 %v1097
    %1137 = vmatpush.msra.mxu0 %v1096
    %1138 = vmatpush.msra.mxu0 %v1095
    %1139 = vmatpush.msra.mxu0 %v1094
    %1140 = vmatpush.msra.mxu0 %v1093
    %1141 = vmatmul.f32.gmra.mxu0 %v1089
    %v1142 = vpop.f32.mrf.mxu0
    %v1143 = vadd.f32 0.0, %v1142
    %1144 = vmatmul.f32.gmra.mxu0 %v1091
    %v1145 = vpop.f32.mrf.mxu0
    %v1146 = vadd.f32 0.0, %v1145
    %1147 = vmatmul.f32.gmra.mxu0 %v1085
    %v1148 = vpop.f32.mrf.mxu0
    %v1149 = vadd.f32 0.0, %v1148
    %1150 = vmatmul.f32.gmra.mxu0 %v1087
    %v1151 = vpop.f32.mrf.mxu0
    %v1152 = vadd.f32 0.0, %v1151
    %1153 = vdwg.mxu0
    %1154 = vmatpush.msra.mxu0 %v1124
    %1155 = vmatpush.msra.mxu0 %v1123
    %1156 = vmatpush.msra.mxu0 %v1122
    %1157 = vmatpush.msra.mxu0 %v1121
    %1158 = vmatpush.msra.mxu0 %v1120
    %1159 = vmatpush.msra.mxu0 %v1119
    %1160 = vmatpush.msra.mxu0 %v1118
    %1161 = vmatpush.msra.mxu0 %v1117
    %1162 = vmatpush.msra.mxu0 %v1116
    %1163 = vmatpush.msra.mxu0 %v1115
    %1164 = vmatpush.msra.mxu0 %v1114
    %1165 = vmatpush.msra.mxu0 %v1113
    %1166 = vmatpush.msra.mxu0 %v1112
    %1167 = vmatpush.msra.mxu0 %v1111
    %1168 = vmatpush.msra.mxu0 %v1110
    %1169 = vmatpush.msra.mxu0 %v1109
    %1170 = vmatmul.f32.gmra.mxu0 %v1090
    %v1171 = vpop.f32.mrf.mxu0
    %v1172 = vadd.f32 %v1143, %v1171
    %1173 = vmatmul.f32.gmra.mxu0 %v1092
    %v1174 = vpop.f32.mrf.mxu0
    %v1175 = vadd.f32 %v1146, %v1174
    %1176 = vmatmul.f32.gmra.mxu0 %v1086
    %v1177 = vpop.f32.mrf.mxu0
    %v1178 = vadd.f32 %v1149, %v1177
    %1179 = vmatmul.f32.gmra.mxu0 %v1088
    %v1180 = vpop.f32.mrf.mxu0
    %v1181 = vadd.f32 %v1152, %v1180
    %1182 = vdwg.mxu0
    %v1183 = vmax.f32 %v1178, 1e-09
    %v1184 = vmax.f32 %v1181, 1e-09
    %v1185 = vrcp.pop %v1183
    %v1186 = vmul.f32 %v1183, %v1185
    %v1187 = vsub.f32 1.0, %v1186
    %v1188 = vmul.f32 %v1185, %v1187
    %v1189 = vadd.f32 %v1185, %v1188
    %vm1190 = vweird.f32 %v1183
    %vm1191 = vweird.f32 %v1185
    %vm1192 = vmor %vm1190, %vm1191
    %v1193 = vsel %vm1192, %v1185, %v1189
    %v1194 = vand.u32 2147483647, %v1183
    %vm1195 = vcmp.eq.f32.partialorder %v1194, 8.507059e+37
    %v1196 = vand.u32 %v1183, 2147483648
    %v1197 = vor.u32 1.1754944e-38, %v1196
    %v1198 = vsel %vm1195, %v1197, %v1193
    %v1199 = vmul.f32 %v1172, %v1198
    %v1200 = vrcp.pop %v1184
    %v1201 = vmul.f32 %v1184, %v1200
    %v1202 = vsub.f32 1.0, %v1201
    %v1203 = vmul.f32 %v1200, %v1202
    %v1204 = vadd.f32 %v1200, %v1203
    %vm1205 = vweird.f32 %v1184
    %vm1206 = vweird.f32 %v1200
    %vm1207 = vmor %vm1205, %vm1206
    %v1208 = vsel %vm1207, %v1200, %v1204
    %v1209 = vand.u32 2147483647, %v1184
    %vm1210 = vcmp.eq.f32.partialorder %v1209, 8.507059e+37
    %v1211 = vand.u32 %v1184, 2147483648
    %v1212 = vor.u32 1.1754944e-38, %v1211
    %v1213 = vsel %vm1210, %v1212, %v1208
    %v1214 = vmul.f32 %v1175, %v1213
    %v1215 = vld [vmem:[#allocation8] sm:$0xff]
    %v1216 = vld [vmem:[#allocation8 + $0x8] sm:$0xff]
    %v1217 = vld [vmem:[#allocation8 + $0x10] sm:$0xff]
    %v1218 = vld [vmem:[#allocation8 + $0x18] sm:$0xff]
    %v1219 = vld [vmem:[#allocation11] sm:$0x1]
    %v1221 = vperm.slane %v1219, 0
    %v1224 = vsel %vm155, %v1199, 0
    %v1227 = vsel %vm155, %v1214, 0
    %1229 = vmatpush.msra.mxu0 0.0
    %1230 = vmatpush.msra.mxu0 0.0
    %1231 = vmatpush.msra.mxu0 0.0
    %1232 = vmatpush.msra.mxu0 0.0
    %1233 = vmatpush.msra.mxu0 0.0
    %1234 = vmatpush.msra.mxu0 0.0
    %1235 = vmatpush.msra.mxu0 0.0
    %1236 = vmatpush.msra.mxu0 0.0
    %1237 = vmatpush.msra.mxu0 0.0
    %1238 = vmatpush.msra.mxu0 0.0
    %1239 = vmatpush.msra.mxu0 0.0
    %1240 = vmatpush.msra.mxu0 0.0
    %1241 = vmatpush.msra.mxu0 %v1218
    %1242 = vmatpush.msra.mxu0 %v1217
    %1243 = vmatpush.msra.mxu0 %v1216
    %1244 = vmatpush.msra.mxu0 %v1215
    %1245 = vmatmul.f32.gmra.mxu0 %v1224
    %v1246 = vpop.f32.mrf.mxu0
    %v1247 = vadd.f32 %v1221, %v1246
    %1248 = vmatmul.f32.gmra.mxu0 %v1227
    %v1249 = vpop.f32.mrf.mxu0
    %v1250 = vadd.f32 %v1221, %v1249
    %1251 = vdwg.mxu0
    %1253 = vset.pattern.permute.xlu0 0
    %1254 = vperm.xlu0 %1253, %v138
    %v1255 = vpop.permute.xlu0 %1254
    %1258 = vset.pattern.permute.xlu0 0
    %1259 = vperm.xlu0 %1258, %v139
    %v1260 = vpop.permute.xlu0 %1259
    %v1262 = vmul.f32 %v1247, %v1255
    %v1263 = vmul.f32 %v1250, %v1260
    %1264 = vst.msk [vmem:[#allocation13] sm:$0xff] %vm155, %v1262
    %1265 = vst.msk [vmem:[#allocation13 + $0x8] sm:$0xff] %vm155, %v1263
    %v1266 = vmul.f32 %v1055, %v1255
    %v1267 = vmul.f32 %v1056, %v1255
    %v1268 = vmul.f32 %v1057, %v1260
    %v1269 = vmul.f32 %v1058, %v1260
    %v1270 = vmul.f32 %v1266, %v559
    %v1271 = vmul.f32 %v1267, %v560
    %v1272 = vmul.f32 %v1268, %v561
    %v1273 = vmul.f32 %v1269, %v562
    %1274 = vst [vmem:[%s12] sm:$0xff] %v1270
    %1275 = vst [vmem:[%s12 + $0x8] sm:$0xff] %v1271
    %1276 = vst [vmem:[%s12 + $0x10] sm:$0xff] %v1272
    %1277 = vst [vmem:[%s12 + $0x18] sm:$0xff] %v1273
    // Predicated region
    $region70: #{mha_forward.1} parent=1 // pred_check
      _
    $region71: #{mha_forward.1} parent=1 // pred_check_branch
      %1279 = sbr.rel (0) target = $region73
    $region72: #{mha_forward.1} parent=1 // pred_region
      %1281 = vsyncadd [#allocation4], 0
      %s1282 = sshll.u32 [#allocation13], 4
      %s1283 = int_to_ptr.vmem [resolvable:$true] %s1282
      %s1284 = sshll.u32 %s11, 4
      %s1285 = int_to_ptr.hbm [resolvable:$true] %s1284
      %1290 = dma.vmem_to_hbm [thread:$0]  %s1283, 256, %s1285, [#allocation4], 128, 128, 8
    $region73: #{mha_forward.1} parent=1 // pred_fallthru
      _
    // Predicated region
    $region74: #{mha_forward.1} parent=1 // pred_check
      _
    $region75: #{mha_forward.1} parent=1 // pred_check_branch
      %1292 = sbr.rel (0) target = $region77
    $region76: #{mha_forward.1} parent=1 // pred_region
      _
    $region77: #{mha_forward.1} parent=1 // pred_fallthru
      _
    // Predicated region
    $region78: #{mha_forward.1} parent=1 // pred_check
      _
    $region79: #{mha_forward.1} parent=1 // pred_check_branch
      %1294 = sbr.rel (0) target = $region81
    $region80: #{mha_forward.1} parent=1 // pred_region
      %1296 = dma.done [#allocation4], 256
    $region81: #{mha_forward.1} parent=1 // pred_fallthru
      _
    // Predicated region
    $region82: #{mha_forward.1} parent=1 // pred_check
      _
    $region83: #{mha_forward.1} parent=1 // pred_check_branch
      %1298 = sbr.rel (0) target = $region85
    $region84: #{mha_forward.1} parent=1 // pred_region
      _
    $region85: #{mha_forward.1} parent=1 // pred_fallthru
      _
    %1299 = vsyncpa [#allocation3], 1
    %1300 = vsyncpa [#allocation6], 1
    %1301 = vsyncpa [#allocation9], 1
    %1302 = vsyncpa [#allocation12], 1
    %1303 = vsyncpa [#allocation4], 1

</llo_original>
